<compile_context>
chip_gen: v7x
topology: tpu7x:2x2x1
jax: 0.10.0
libtpu: 0.0.40
codegen_flags: <defaults>
</compile_context>

<pallas_src>
import functools
import math

import jax
import jax.numpy as jnp
import numpy as np
from jax import lax
from jax.experimental import pallas as pl
from jax.experimental.pallas import tpu as pltpu


# ---------------------------------------------------------------------------
# Generation-aware VMEM budget
# ---------------------------------------------------------------------------
@functools.lru_cache(maxsize=None)
def _vmem_budget_bytes():
    """~half the physical VMEM: ~32 MiB on v7x, ~64 MiB on v5e/v6e."""
    try:
        cap = int(pltpu.get_tpu_info().vmem_capacity_bytes)
    except Exception:  # no/unknown TPU info -> conservative v7x-safe default
        cap = 64 * 1024 * 1024
    return int(min(max(cap // 2, 32 * 1024 * 1024), 96 * 1024 * 1024))


# ---------------------------------------------------------------------------
# Tiled linear:  y = x @ W^T + b   (W passed pre-transposed as (d_in, d_out))
# ---------------------------------------------------------------------------
def _linear_kernel(x_ref, wt_ref, b_ref, o_ref, acc_ref):
    """One (tm, tn) output tile; K-reduction over grid axis 2."""
    k = pl.program_id(2)

    @pl.when(k == 0)
    def _():
        acc_ref[...] = jnp.zeros_like(acc_ref)

    acc_ref[...] += jnp.dot(x_ref[...], wt_ref[...],
                            preferred_element_type=jnp.float32)

    @pl.when(k == pl.num_programs(2) - 1)
    def _():
        o_ref[...] = (acc_ref[...] + b_ref[...]).astype(o_ref.dtype)


def _pick_div_tile(dim, target, quantum):
    """Largest multiple of `quantum` dividing `dim` and <= target; else `dim`."""
    if dim <= target:
        return dim
    best = None
    for t in range(quantum, target + 1, quantum):
        if dim % t == 0:
            best = t
    return best if best is not None else dim


def pallas_linear(x2d, w_t, b, *, out_dtype):
    """x2d: (N, d_in); w_t: (d_in, d_out); b: (d_out,) -> (N, d_out)."""
    n, d_in = x2d.shape
    d_out = w_t.shape[1]
    x_isz = jnp.dtype(x2d.dtype).itemsize
    w_isz = jnp.dtype(w_t.dtype).itemsize
    o_isz = jnp.dtype(out_dtype).itemsize

    budget = _vmem_budget_bytes()
    tile_budget = (budget * 3) // 4

    # Weight residency: if the (double-buffered) W^T fits in half the tile
    # budget, its block index is constant -> DMA'd once for the whole call
    # instead of once per row tile.
    if 2 * d_in * d_out * w_isz <= tile_budget // 2:
        tk, tn = d_in, d_out
    else:
        tk = _pick_div_tile(d_in, 512, 128)
        tn = _pick_div_tile(d_out, 256, 128)

    # Rows per step: fill the remaining budget (lane-dense output tiles),
    # capped at 512 rows (~85% of HBM roofline for f32 adds/matmuls).
    rem = tile_budget - 2 * tk * tn * w_isz - 2 * tn * 4
    per_row = 2 * tk * x_isz + 2 * tn * o_isz + 4 * tn   # x dbuf + out dbuf + acc
    tm = max(8, min(512, (rem // max(per_row, 1)) // 8 * 8))
    if n <= tm:
        tm = n

    grid = (pl.cdiv(n, tm), pl.cdiv(d_out, tn), pl.cdiv(d_in, tk))
    cost = pl.CostEstimate(
        flops=2 * n * d_in * d_out,
        transcendentals=0,
        bytes_accessed=(n * d_in * x_isz + d_in * d_out * w_isz
                        + n * d_out * o_isz + 4 * d_out))

    return pl.pallas_call(
        _linear_kernel,
        out_shape=jax.ShapeDtypeStruct((n, d_out), out_dtype),
        grid_spec=pltpu.PrefetchScalarGridSpec(
            num_scalar_prefetch=0,
            grid=grid,
            in_specs=[
                pl.BlockSpec((tm, tk), lambda i, j, k: (i, k)),
                pl.BlockSpec((tk, tn), lambda i, j, k: (k, j)),
                pl.BlockSpec((1, tn), lambda i, j, k: (0, j)),
            ],
            out_specs=pl.BlockSpec((tm, tn), lambda i, j, k: (i, j)),
            scratch_shapes=[pltpu.VMEM((tm, tn), jnp.float32)],
        ),
        compiler_params=pltpu.CompilerParams(
            dimension_semantics=("parallel", "parallel", "arbitrary"),
            vmem_limit_bytes=budget,
        ),
        cost_estimate=cost,
    )(x2d, w_t, b.reshape(1, d_out).astype(jnp.float32))


# ---------------------------------------------------------------------------
# Attention tiling helpers
# ---------------------------------------------------------------------------
def _tile_candidates(dim, target):
    """Descending tile sizes that evenly divide `dim` (8-aligned), else [dim]."""
    if dim <= target:
        return [dim]
    out = []
    for tgt in (target, target // 2, target // 4):
        best = None
        for t in range(8, max(tgt, 8) + 1, 8):
            if dim % t == 0:
                best = t
        if best is not None and best not in out:
            out.append(best)
    out.sort(reverse=True)
    return out or [dim]


def _block_ok(width, arr_last, off):
    """Is a (..., width) lane window at element offset `off` a legal BlockSpec?"""
    if off % width != 0:
        return False
    return width % 128 == 0 or (off == 0 and width == arr_last)


def _legal_groups(H, dk, dv, q_last, k_last, v_last, q_off, k_off, v_off):
    return [g for g in range(1, H + 1)
            if H % g == 0
            and _block_ok(g * dk, q_last, q_off)
            and _block_ok(g * dk, k_last, k_off)
            and _block_ok(g * dv, v_last, v_off)]


def _attn_vmem_bytes(g, tl, ts, attn_cols, dk, dv, itemsize):
    blocks = 2 * itemsize * g * (tl * dk + ts * dk + ts * dv + tl * dv)
    scratch = 4 * g * tl * (dv + 2)                 # flash m/l/acc
    attn_out = 2 * 4 * g * tl * attn_cols           # double-buffered attn block
    # conservative: the static head unroll can keep every head's f32 (tl, ts)
    # score/prob temporaries live simultaneously
    temps = 2 * 4 * g * tl * max(ts, attn_cols)
    return blocks + scratch + attn_out + temps


def _attn_tiling(legal_g, L, S, dk, dv, itemsize, want_attn, budget,
                 tl_target, ts_target):
    tl_cands = _tile_candidates(L, tl_target)
    ts_cands = [S] if want_attn else _tile_candidates(S, ts_target)
    attn_cols = S if want_attn else 0
    for tl in tl_cands:
        for ts in ts_cands:
            for g in sorted(legal_g, reverse=True):
                if _attn_vmem_bytes(g, tl, ts, attn_cols, dk, dv,
                                    itemsize) <= budget:
                    return g, tl, ts
    return min(legal_g), tl_cands[-1], ts_cands[-1]


# ---------------------------------------------------------------------------
# Attention kernels
# ---------------------------------------------------------------------------
def _attn_softmax_kernel(q_ref, k_ref, v_ref, o_ref, a_ref, *, g, dk, dv, scale):
    """Full softmax over S (only used when attention weights are requested)."""
    for h in range(g):                          # static unroll over group heads
        q = q_ref[0, :, h * dk:(h + 1) * dk]
        k = k_ref[0, :, h * dk:(h + 1) * dk]
        v = v_ref[0, :, h * dv:(h + 1) * dv]
        qs = (q.astype(jnp.float32) * scale).astype(q.dtype)   # scale Q, not S
        s = lax.dot_general(qs, k, dimension_numbers=(((1,), (1,)), ((), ())),
                            preferred_element_type=jnp.float32)        # (tl, S)
        m = jnp.max(s, axis=-1, keepdims=True)
        p = jnp.exp(s - m)
        denom = jnp.sum(p, axis=-1, keepdims=True)
        inv = pl.reciprocal(denom, approx=False)    # exact: attn rows sum to 1
        pv = jnp.dot(p.astype(v.dtype), v, preferred_element_type=jnp.float32)
        # normalize AFTER the PV matmul: (tl, dv) muls instead of (tl, S)
        o_ref[0, :, h * dv:(h + 1) * dv] = (pv * inv).astype(o_ref.dtype)
        a_ref[0, h] = (p * inv).astype(a_ref.dtype)


def _attn_flash_kernel(q_ref, k_ref, v_ref, o_ref, m_sc, l_sc, acc_sc,
                       *, g, dk, dv, scale, approx):
    """Online-softmax over the S grid axis (no attention weights materialized)."""
    si = pl.program_id(3)

    @pl.when(si == 0)
    def _():
        m_sc[...] = jnp.full(m_sc.shape, -jnp.inf, jnp.float32)
        l_sc[...] = jnp.zeros(l_sc.shape, jnp.float32)
        acc_sc[...] = jnp.zeros(acc_sc.shape, jnp.float32)

    for h in range(g):                          # static unroll over group heads
        q = q_ref[0, :, h * dk:(h + 1) * dk]
        k = k_ref[0, :, h * dk:(h + 1) * dk]
        v = v_ref[0, :, h * dv:(h + 1) * dv]
        qs = (q.astype(jnp.float32) * scale).astype(q.dtype)
        s = lax.dot_general(qs, k, dimension_numbers=(((1,), (1,)), ((), ())),
                            preferred_element_type=jnp.float32)       # (tl, ts)
        m_prev = m_sc[h]
        m_new = jnp.maximum(m_prev, jnp.max(s, axis=-1, keepdims=True))
        alpha = jnp.exp(m_prev - m_new)
        p = jnp.exp(s - m_new)
        l_sc[h] = alpha * l_sc[h] + jnp.sum(p, axis=-1, keepdims=True)
        acc_sc[h] = alpha * acc_sc[h] + jnp.dot(
            p.astype(v.dtype), v, preferred_element_type=jnp.float32)
        m_sc[h] = m_new

    @pl.when(si == pl.num_programs(3) - 1)
    def _():
        for h in range(g):
            inv = pl.reciprocal(l_sc[h], approx=approx)
            o_ref[0, :, h * dv:(h + 1) * dv] = (acc_sc[h] * inv).astype(o_ref.dtype)


def pallas_full_attention(q, k, v, *, n_heads, d_keys, d_values,
                          output_attention, out_dtype, approx_recip,
                          q_off=0, k_off=0, v_off=0,
                          tl_target=256, ts_target=512):
    """Un-masked scaled-dot-product attention over packed (B, L, H*dk) layouts.

    q/k/v may alias the same fused (B, L, 2*H*dk + H*dv) array; the *_off
    element offsets select the Q/K/V column ranges purely through the BlockSpec
    index_maps (no XLA slice copies)."""
    H, dk, dv = n_heads, d_keys, d_values
    B, L = q.shape[0], q.shape[1]
    S = k.shape[1]
    scale = 1.0 / math.sqrt(dk)
    itemsize = jnp.dtype(q.dtype).itemsize

    legal_g = _legal_groups(H, dk, dv, q.shape[-1], k.shape[-1], v.shape[-1],
                            q_off, k_off, v_off)
    if not legal_g:
        raise ValueError("no lane-legal head grouping for the given layout")
    budget = _vmem_budget_bytes()
    g, tl, ts = _attn_tiling(legal_g, L, S, dk, dv, itemsize,
                             output_attention, (budget * 3) // 4,
                             tl_target, ts_target)
    qob, kob, vob = q_off // (g * dk), k_off // (g * dk), v_off // (g * dv)

    o_shape = jax.ShapeDtypeStruct((B, L, H * dv), out_dtype)
    cost = pl.CostEstimate(
        flops=2 * B * H * L * S * (dk + dv),
        transcendentals=B * H * L * S,
        bytes_accessed=(itemsize * B * (L * H * dk + S * H * (dk + dv)
                                        + L * H * dv)
                        + (4 * B * H * L * S if output_attention else 0)))

    if output_attention:
        grid = (B, H // g, L // tl)
        in_specs = [
            pl.BlockSpec((1, tl, g * dk), lambda b, j, li: (b, li, j + qob)),
            pl.BlockSpec((1, S, g * dk), lambda b, j, li: (b, 0, j + kob)),
            pl.BlockSpec((1, S, g * dv), lambda b, j, li: (b, 0, j + vob)),
        ]
        o_spec = pl.BlockSpec((1, tl, g * dv), lambda b, j, li: (b, li, j))
        a_spec = pl.BlockSpec((1, g, tl, S), lambda b, j, li: (b, j, li, 0))
        a_shape = jax.ShapeDtypeStruct((B, H, L, S), jnp.float32)
        kernel = functools.partial(_attn_softmax_kernel, g=g, dk=dk, dv=dv,
                                   scale=scale)
        out, attn = pl.pallas_call(
            kernel,
            out_shape=(o_shape, a_shape),
            grid_spec=pltpu.PrefetchScalarGridSpec(
                num_scalar_prefetch=0, grid=grid,
                in_specs=in_specs, out_specs=(o_spec, a_spec)),
            compiler_params=pltpu.CompilerParams(
                dimension_semantics=("parallel", "parallel", "parallel"),
                vmem_limit_bytes=budget),
            cost_estimate=cost,
        )(q, k, v)
        return out, attn

    grid = (B, H // g, L // tl, S // ts)
    in_specs = [
        pl.BlockSpec((1, tl, g * dk), lambda b, j, li, si: (b, li, j + qob)),
        pl.BlockSpec((1, ts, g * dk), lambda b, j, li, si: (b, si, j + kob)),
        pl.BlockSpec((1, ts, g * dv), lambda b, j, li, si: (b, si, j + vob)),
    ]
    o_spec = pl.BlockSpec((1, tl, g * dv), lambda b, j, li, si: (b, li, j))
    kernel = functools.partial(_attn_flash_kernel, g=g, dk=dk, dv=dv,
                               scale=scale, approx=approx_recip)
    out = pl.pallas_call(
        kernel,
        out_shape=o_shape,
        grid_spec=pltpu.PrefetchScalarGridSpec(
            num_scalar_prefetch=0, grid=grid,
            in_specs=in_specs, out_specs=o_spec,
            scratch_shapes=[pltpu.VMEM((g, tl, 1), jnp.float32),
                            pltpu.VMEM((g, tl, 1), jnp.float32),
                            pltpu.VMEM((g, tl, dv), jnp.float32)]),
        compiler_params=pltpu.CompilerParams(
            dimension_semantics=("parallel", "parallel", "parallel",
                                 "arbitrary"),
            vmem_limit_bytes=budget),
        cost_estimate=cost,
    )(q, k, v)
    return out, None


# ---------------------------------------------------------------------------
# AttentionLayer (forward only)
# ---------------------------------------------------------------------------
def init_attention_layer_params(key, d_model, n_heads, d_keys=None, d_values=None):
    d_keys = d_keys or d_model // n_heads
    d_values = d_values or d_model // n_heads

    def linear_init(k, out_f, in_f):
        kw, kb = jax.random.split(k)
        bound = 1.0 / math.sqrt(in_f)
        w = jax.random.uniform(kw, (out_f, in_f), jnp.float32, -bound, bound)
        b = jax.random.uniform(kb, (out_f,), jnp.float32, -bound, bound)
        return w, b

    kq, kk, kv, ko = jax.random.split(key, 4)
    return {
        "q": linear_init(kq, d_keys * n_heads, d_model),
        "k": linear_init(kk, d_keys * n_heads, d_model),
        "v": linear_init(kv, d_values * n_heads, d_model),
        "o": linear_init(ko, d_model, d_values * n_heads),
    }


@functools.partial(jax.jit, static_argnames=("n_heads", "output_attention",
                                             "compute_dtype", "fuse_qkv"))
def attention_layer_forward(params, queries, keys, values, n_heads,
                            output_attention=True, compute_dtype=jnp.float32,
                            fuse_qkv=False):
    """AttentionLayer forward (un-masked FullAttention inner attention).

    fuse_qkv=True asserts queries/keys/values are the same tensor
    (self-attention) and runs a single fused QKV projection."""
    B, L, d_model = queries.shape
    _, S, _ = keys.shape
    H = n_heads
    in_dtype = queries.dtype
    cd = compute_dtype

    wq, bq = params["q"]
    wk, bk = params["k"]
    wv, bv = params["v"]
    wo, bo = params["o"]
    hdk, hdv = wq.shape[0], wv.shape[0]
    dk, dv = hdk // H, hdv // H

    # One-time layout/dtype plumbing done by XLA in the wrapper: PyTorch
    # (out,in) -> (in,out), bf16 cast here (not inside the kernels).
    wq_t = wq.T.astype(cd)
    wk_t = wk.T.astype(cd)
    wv_t = wv.T.astype(cd)
    wo_t = wo.T.astype(cd)

    approx = (cd != jnp.float32)

    if fuse_qkv:
        # Single fused QKV projection: streams the activation once.
        w_qkv_t = jnp.concatenate([wq_t, wk_t, wv_t], axis=1)
        b_qkv = jnp.concatenate([bq, bk, bv])
        qkv = pallas_linear(queries.reshape(B * L, d_model).astype(cd),
                            w_qkv_t, b_qkv, out_dtype=cd)
        fused_last = 2 * hdk + hdv
        qkv = qkv.reshape(B, L, fused_last)
        if _legal_groups(H, dk, dv, fused_last, fused_last, fused_last,
                         0, hdk, 2 * hdk):
            # attention reads Q/K/V straight out of the fused layout
            out, attn = pallas_full_attention(
                qkv, qkv, qkv, n_heads=H, d_keys=dk, d_values=dv,
                output_attention=output_attention, out_dtype=cd,
                approx_recip=approx, q_off=0, k_off=hdk, v_off=2 * hdk)
        else:
            # head groups too narrow for offset lane windows: split in XLA
            q2 = qkv[..., :hdk]
            k2 = qkv[..., hdk:2 * hdk]
            v2 = qkv[..., 2 * hdk:]
            out, attn = pallas_full_attention(
                q2, k2, v2, n_heads=H, d_keys=dk, d_values=dv,
                output_attention=output_attention, out_dtype=cd,
                approx_recip=approx)
    else:
        # TODO(synk): when only keys/values alias (cross-attention), the K and V
        #             projections could be fused the same way.
        q2 = pallas_linear(queries.reshape(B * L, d_model).astype(cd), wq_t, bq,
                           out_dtype=cd).reshape(B, L, hdk)
        k2 = pallas_linear(keys.reshape(B * S, d_model).astype(cd), wk_t, bk,
                           out_dtype=cd).reshape(B, S, hdk)
        v2 = pallas_linear(values.reshape(B * S, d_model).astype(cd), wv_t, bv,
                           out_dtype=cd).reshape(B, S, hdv)
        out, attn = pallas_full_attention(
            q2, k2, v2, n_heads=H, d_keys=dk, d_values=dv,
            output_attention=output_attention, out_dtype=cd,
            approx_recip=approx)

    # Attention output is already (B, L, H*dv): feed the o-projection directly.
    out = pallas_linear(out.reshape(B * L, hdv), wo_t, bo, out_dtype=in_dtype)
    return out.reshape(B, L, d_model), attn


# ---------------------------------------------------------------------------
# Pure-JAX references for correctness checks
# ---------------------------------------------------------------------------
def reference_forward(params, queries, keys, values, n_heads):
    B, L, d_model = queries.shape
    _, S, _ = keys.shape
    H = n_heads
    wq, bq = params["q"]
    wk, bk = params["k"]
    wv, bv = params["v"]
    wo, bo = params["o"]
    q = (queries @ wq.T + bq).reshape(B, L, H, -1)
    k = (keys @ wk.T + bk).reshape(B, S, H, -1)
    v = (values @ wv.T + bv).reshape(B, S, H, -1)
    E = q.shape[-1]
    s = jnp.einsum("blhe,bshe->bhls", q, k) / math.sqrt(E)
    p = jax.nn.softmax(s, axis=-1)
    o = jnp.einsum("bhls,bshd->blhd", p, v).reshape(B, L, -1)
    return o @ wo.T + bo, p


def _attn_reference(q, k, v, n_heads):
    B, L, hdk = q.shape
    S = k.shape[1]
    dk = hdk // n_heads
    dv = v.shape[-1] // n_heads
    qh = q.reshape(B, L, n_heads, dk)
    kh = k.reshape(B, S, n_heads, dk)
    vh = v.reshape(B, S, n_heads, dv)
    s = jnp.einsum("blhe,bshe->bhls", qh, kh) / math.sqrt(dk)
    p = jax.nn.softmax(s, axis=-1)
    return jnp.einsum("bhls,bshd->blhd", p, vh).reshape(B, L, n_heads * dv)


if __name__ == "__main__":
    key = jax.random.PRNGKey(0)
    kp, kq, kk, kv, kp2, kx = jax.random.split(key, 6)

    # ---- Tests 1/2: cross-attention, d_model=32, H=4 (dk=dv=8) -------------
    B, L, S = 2, 8, 16
    d_model, n_heads = 32, 4

    params = init_attention_layer_params(kp, d_model, n_heads)
    queries = jax.random.normal(kq, (B, L, d_model), jnp.float32)
    keys = jax.random.normal(kk, (B, S, d_model), jnp.float32)
    values = jax.random.normal(kv, (B, S, d_model), jnp.float32)

    ref_out, ref_attn = reference_forward(params, queries, keys, values, n_heads)

    # 1) strict-precision path: f32 matmuls, attention weights returned
    out32, attn32 = attention_layer_forward(
        params, queries, keys, values, n_heads,
        output_attention=True, compute_dtype=jnp.float32)
    jax.block_until_ready((out32, attn32))
    np.testing.assert_allclose(np.asarray(out32), np.asarray(ref_out),
                               rtol=1e-3, atol=1e-3)
    np.testing.assert_allclose(np.asarray(attn32), np.asarray(ref_attn),
                               rtol=1e-3, atol=1e-3)

    # 2) fast path: bf16 MXU inputs / f32 accumulation, flash attention, no attn
    out16, attn16 = attention_layer_forward(
        params, queries, keys, values, n_heads,
        output_attention=False, compute_dtype=jnp.bfloat16)
    jax.block_until_ready(out16)
    assert attn16 is None
    np.testing.assert_allclose(np.asarray(out16, dtype=np.float32),
                               np.asarray(ref_out), rtol=2e-2, atol=2e-2)

    # 3) fused self-attention with 128-lane-aligned heads (fused-layout path)
    d_model2, n_heads2 = 256, 2
    params2 = init_attention_layer_params(kp2, d_model2, n_heads2)
    x = jax.random.normal(kx, (B, L, d_model2), jnp.float32)
    ref_out2, ref_attn2 = reference_forward(params2, x, x, x, n_heads2)
    out_f, attn_f = attention_layer_forward(
        params2, x, x, x, n_heads2, output_attention=True,
        compute_dtype=jnp.float32, fuse_qkv=True)
    jax.block_until_ready((out_f, attn_f))
    np.testing.assert_allclose(np.asarray(out_f), np.asarray(ref_out2),
                               rtol=1e-3, atol=1e-3)
    np.testing.assert_allclose(np.asarray(attn_f), np.asarray(ref_attn2),
                               rtol=1e-3, atol=1e-3)

    # 4) flash path with multiple S (and L) grid steps (online-softmax check)
    kq4, kk4, kv4 = jax.random.split(jax.random.PRNGKey(1), 3)
    Hq, dk4 = 4, 8
    q4 = jax.random.normal(kq4, (1, 16, Hq * dk4), jnp.float32)
    k4 = jax.random.normal(kk4, (1, 32, Hq * dk4), jnp.float32)
    v4 = jax.random.normal(kv4, (1, 32, Hq * dk4), jnp.float32)
    out4, _ = pallas_full_attention(
        q4, k4, v4, n_heads=Hq, d_keys=dk4, d_values=dk4,
        output_attention=False, out_dtype=jnp.float32, approx_recip=False,
        tl_target=8, ts_target=8)
    jax.block_until_ready(out4)
    np.testing.assert_allclose(np.asarray(out4),
                               np.asarray(_attn_reference(q4, k4, v4, Hq)),
                               rtol=1e-3, atol=1e-3)

    print("KERNEL_OK")
</pallas_src>

<mosaic_0001>
module attributes {stable_mosaic.version = 11 : i64} {
  func.func @_linear_kernel(%arg0: i32, %arg1: i32, %arg2: i32, %arg3: memref<32x32xf32, #tpu.memory_space<vmem>>, %arg4: memref<32x32xf32, #tpu.memory_space<vmem>>, %arg5: memref<1x32xf32, #tpu.memory_space<vmem>>, %arg6: memref<32x32xf32, #tpu.memory_space<vmem>>, %arg7: memref<32x32xf32, #tpu.memory_space<vmem>>) attributes {dimension_semantics = [#tpu.dimension_semantics<parallel>, #tpu.dimension_semantics<parallel>, #tpu.dimension_semantics<arbitrary>], iteration_bounds = array<i64: 1, 1, 1>, scalar_prefetch = 0 : i64, scratch_operands = 1 : i64, tpu.core_type = #tpu.core_type<tc>, window_params = [{transform_indices = @transform_0, window_bounds = array<i64: 32, 32>}, {transform_indices = @transform_1, window_bounds = array<i64: 32, 32>}, {transform_indices = @transform_2, window_bounds = array<i64: 1, 32>}, {transform_indices = @transform_3, window_bounds = array<i64: 32, 32>}]} {
    %c0_i32 = arith.constant 0 : i32
    %0 = arith.cmpi eq, %arg2, %c0_i32 : i32
    %1 = arith.extui %0 : i1 to i32
    %c0_i32_0 = arith.constant 0 : i32
    %2 = arith.cmpi ne, %1, %c0_i32_0 : i32
    scf.if %2 {
      %cst_10 = arith.constant 0.000000e+00 : f32
      %12 = vector.broadcast %cst_10 : f32 to vector<32x32xf32>
      %c0_11 = arith.constant 0 : index
      %c0_12 = arith.constant 0 : index
      %13 = vector.load %arg7[%c0_11, %c0_12] : memref<32x32xf32, #tpu.memory_space<vmem>>, vector<32x32xf32>
      tpu.vector_store %arg7[%c0_11, %c0_12], %12 {strides = array<i32>} : memref<32x32xf32, #tpu.memory_space<vmem>>, vector<32x32xf32>,
    } else {
    }
    %c0 = arith.constant 0 : index
    %c0_1 = arith.constant 0 : index
    %3 = vector.load %arg7[%c0, %c0_1] : memref<32x32xf32, #tpu.memory_space<vmem>>, vector<32x32xf32>
    %c0_2 = arith.constant 0 : index
    %c0_3 = arith.constant 0 : index
    %4 = vector.load %arg3[%c0_2, %c0_3] : memref<32x32xf32, #tpu.memory_space<vmem>>, vector<32x32xf32>
    %c0_4 = arith.constant 0 : index
    %c0_5 = arith.constant 0 : index
    %5 = vector.load %arg4[%c0_4, %c0_5] : memref<32x32xf32, #tpu.memory_space<vmem>>, vector<32x32xf32>
    %cst = arith.constant dense<0.000000e+00> : vector<32x32xf32>
    %6 = tpu.matmul %4, %5, %cst {dimension_numbers = #tpu.dot_dimension_numbers<[1], [0], [0], [1], [0, 0, 1, 1], [], []>} : vector<32x32xf32>, vector<32x32xf32>, vector<32x32xf32> -> vector<32x32xf32>
    %7 = arith.addf %3, %6 : vector<32x32xf32>
    %c0_6 = arith.constant 0 : index
    %c0_7 = arith.constant 0 : index
    %8 = vector.load %arg7[%c0_6, %c0_7] : memref<32x32xf32, #tpu.memory_space<vmem>>, vector<32x32xf32>
    tpu.vector_store %arg7[%c0_6, %c0_7], %7 {strides = array<i32>} : memref<32x32xf32, #tpu.memory_space<vmem>>, vector<32x32xf32>,
    %c0_i32_8 = arith.constant 0 : i32
    %9 = arith.cmpi eq, %arg2, %c0_i32_8 : i32
    %10 = arith.extui %9 : i1 to i32
    %c0_i32_9 = arith.constant 0 : i32
    %11 = arith.cmpi ne, %10, %c0_i32_9 : i32
    scf.if %11 {
      %c0_10 = arith.constant 0 : index
      %c0_11 = arith.constant 0 : index
      %12 = vector.load %arg7[%c0_10, %c0_11] : memref<32x32xf32, #tpu.memory_space<vmem>>, vector<32x32xf32>
      %c0_12 = arith.constant 0 : index
      %c0_13 = arith.constant 0 : index
      %13 = vector.load %arg5[%c0_12, %c0_13] : memref<1x32xf32, #tpu.memory_space<vmem>>, vector<1x32xf32>
      %14 = vector.broadcast %13 : vector<1x32xf32> to vector<32x32xf32>
      %15 = arith.addf %12, %14 : vector<32x32xf32>
      %c0_14 = arith.constant 0 : index
      %c0_15 = arith.constant 0 : index
      %16 = vector.load %arg6[%c0_14, %c0_15] : memref<32x32xf32, #tpu.memory_space<vmem>>, vector<32x32xf32>
      tpu.vector_store %arg6[%c0_14, %c0_15], %15 {strides = array<i32>} : memref<32x32xf32, #tpu.memory_space<vmem>>, vector<32x32xf32>,
    } else {
    }
    return
  }
  func.func @transform_0(%arg0: i32, %arg1: i32, %arg2: i32) -> (i32, i32) {
    %c0_i32 = arith.constant 0 : i32
    return %arg0, %arg2 : i32, i32
  }
  func.func @transform_1(%arg0: i32, %arg1: i32, %arg2: i32) -> (i32, i32) {
    %c0_i32 = arith.constant 0 : i32
    return %arg2, %arg1 : i32, i32
  }
  func.func @transform_2(%arg0: i32, %arg1: i32, %arg2: i32) -> (i32, i32) {
    %c0_i32 = arith.constant 0 : i32
    %c0_i32_0 = arith.constant 0 : i32
    return %c0_i32, %arg1 : i32, i32
  }
  func.func @transform_3(%arg0: i32, %arg1: i32, %arg2: i32) -> (i32, i32) {
    %c0_i32 = arith.constant 0 : i32
    return %arg0, %arg1 : i32, i32
  }
}

module attributes {stable_mosaic.version = 11 : i64} {
  func.func @_attn_softmax_kernel(%arg0: i32, %arg1: i32, %arg2: i32, %arg3: memref<1x8x32xf32, #tpu.memory_space<vmem>>, %arg4: memref<1x16x32xf32, #tpu.memory_space<vmem>>, %arg5: memref<1x16x32xf32, #tpu.memory_space<vmem>>, %arg6: memref<1x8x32xf32, #tpu.memory_space<vmem>>, %arg7: memref<1x4x8x16xf32, #tpu.memory_space<vmem>>) attributes {dimension_semantics = [#tpu.dimension_semantics<parallel>, #tpu.dimension_semantics<parallel>, #tpu.dimension_semantics<parallel>], iteration_bounds = array<i64: 2, 1, 1>, scalar_prefetch = 0 : i64, scratch_operands = 0 : i64, tpu.core_type = #tpu.core_type<tc>, window_params = [{transform_indices = @transform_0, window_bounds = array<i64: 1, 8, 32>}, {transform_indices = @transform_1, window_bounds = array<i64: 1, 16, 32>}, {transform_indices = @transform_2, window_bounds = array<i64: 1, 16, 32>}, {transform_indices = @transform_3, window_bounds = array<i64: 1, 8, 32>}, {transform_indices = @transform_4, window_bounds = array<i64: 1, 4, 8, 16>}]} {
    %c0 = arith.constant 0 : index
    %c0_0 = arith.constant 0 : index
    %c0_1 = arith.constant 0 : index
    %0 = vector.load %arg3[%c0, %c0_0, %c0_1] : memref<1x8x32xf32, #tpu.memory_space<vmem>>, vector<1x8x8xf32>
    %1 = vector.shape_cast %0 : vector<1x8x8xf32> to vector<8x8xf32>
    %c0_2 = arith.constant 0 : index
    %c0_3 = arith.constant 0 : index
    %c0_4 = arith.constant 0 : index
    %2 = vector.load %arg4[%c0_2, %c0_3, %c0_4] : memref<1x16x32xf32, #tpu.memory_space<vmem>>, vector<1x16x8xf32>
    %3 = vector.shape_cast %2 : vector<1x16x8xf32> to vector<16x8xf32>
    %c0_5 = arith.constant 0 : index
    %c0_6 = arith.constant 0 : index
    %c0_7 = arith.constant 0 : index
    %4 = vector.load %arg5[%c0_5, %c0_6, %c0_7] : memref<1x16x32xf32, #tpu.memory_space<vmem>>, vector<1x16x8xf32>
    %5 = vector.shape_cast %4 : vector<1x16x8xf32> to vector<16x8xf32>
    %cst = arith.constant 0.353553385 : f32
    %6 = vector.broadcast %cst : f32 to vector<8x8xf32>
    %7 = arith.mulf %1, %6 : vector<8x8xf32>
    %cst_8 = arith.constant dense<0.000000e+00> : vector<8x16xf32>
    %8 = tpu.matmul %7, %3, %cst_8 {dimension_numbers = #tpu.dot_dimension_numbers<[1], [1], [0], [0], [0, 0, 1, 0], [], []>} : vector<8x8xf32>, vector<16x8xf32>, vector<8x16xf32> -> vector<8x16xf32>
    %cst_9 = arith.constant dense<0xFF800000> : vector<8xf32>
    %9 = vector.multi_reduction <maximumf>, %8, %cst_9 [1] : vector<8x16xf32> to vector<8xf32>
    %10 = vector.shape_cast %9 : vector<8xf32> to vector<8x1xf32>
    %11 = vector.broadcast %10 : vector<8x1xf32> to vector<8x16xf32>
    %12 = arith.subf %8, %11 : vector<8x16xf32>
    %13 = math.exp %12 : vector<8x16xf32>
    %cst_10 = arith.constant dense<0.000000e+00> : vector<8xf32>
    %14 = vector.multi_reduction <add>, %13, %cst_10 [1] : vector<8x16xf32> to vector<8xf32>
    %15 = vector.shape_cast %14 : vector<8xf32> to vector<8x1xf32>
    %16 = tpu.reciprocal %15 : vector<8x1xf32> -> vector<8x1xf32>
    %cst_11 = arith.constant dense<0.000000e+00> : vector<8x8xf32>
    %17 = tpu.matmul %13, %5, %cst_11 {dimension_numbers = #tpu.dot_dimension_numbers<[1], [0], [0], [1], [0, 0, 1, 1], [], []>} : vector<8x16xf32>, vector<16x8xf32>, vector<8x8xf32> -> vector<8x8xf32>
    %18 = vector.broadcast %16 : vector<8x1xf32> to vector<8x8xf32>
    %19 = arith.mulf %17, %18 : vector<8x8xf32>
    %c0_12 = arith.constant 0 : index
    %c0_13 = arith.constant 0 : index
    %c0_14 = arith.constant 0 : index
    %20 = vector.load %arg6[%c0_12, %c0_13, %c0_14] : memref<1x8x32xf32, #tpu.memory_space<vmem>>, vector<1x8x8xf32>
    %21 = vector.shape_cast %20 : vector<1x8x8xf32> to vector<8x8xf32>
    %22 = vector.shape_cast %19 : vector<8x8xf32> to vector<1x8x8xf32>
    tpu.vector_store %arg6[%c0_12, %c0_13, %c0_14], %22 {strides = array<i32>} : memref<1x8x32xf32, #tpu.memory_space<vmem>>, vector<1x8x8xf32>,
    %23 = vector.broadcast %16 : vector<8x1xf32> to vector<8x16xf32>
    %24 = arith.mulf %13, %23 : vector<8x16xf32>
    %c0_15 = arith.constant 0 : index
    %c0_16 = arith.constant 0 : index
    %c0_17 = arith.constant 0 : index
    %c0_18 = arith.constant 0 : index
    %25 = vector.load %arg7[%c0_15, %c0_16, %c0_17, %c0_18] : memref<1x4x8x16xf32, #tpu.memory_space<vmem>>, vector<1x1x8x16xf32>
    %26 = vector.shape_cast %25 : vector<1x1x8x16xf32> to vector<8x16xf32>
    %27 = vector.shape_cast %24 : vector<8x16xf32> to vector<1x1x8x16xf32>
    tpu.vector_store %arg7[%c0_15, %c0_16, %c0_17, %c0_18], %27 {strides = array<i32>} : memref<1x4x8x16xf32, #tpu.memory_space<vmem>>, vector<1x1x8x16xf32>,
    %c0_19 = arith.constant 0 : index
    %c0_20 = arith.constant 0 : index
    %c8 = arith.constant 8 : index
    %28 = vector.load %arg3[%c0_19, %c0_20, %c8] : memref<1x8x32xf32, #tpu.memory_space<vmem>>, vector<1x8x8xf32>
    %29 = vector.shape_cast %28 : vector<1x8x8xf32> to vector<8x8xf32>
    %c0_21 = arith.constant 0 : index
    %c0_22 = arith.constant 0 : index
    %c8_23 = arith.constant 8 : index
    %30 = vector.load %arg4[%c0_21, %c0_22, %c8_23] : memref<1x16x32xf32, #tpu.memory_space<vmem>>, vector<1x16x8xf32>
    %31 = vector.shape_cast %30 : vector<1x16x8xf32> to vector<16x8xf32>
    %c0_24 = arith.constant 0 : index
    %c0_25 = arith.constant 0 : index
    %c8_26 = arith.constant 8 : index
    %32 = vector.load %arg5[%c0_24, %c0_25, %c8_26] : memref<1x16x32xf32, #tpu.memory_space<vmem>>, vector<1x16x8xf32>
    %33 = vector.shape_cast %32 : vector<1x16x8xf32> to vector<16x8xf32>
    %cst_27 = arith.constant 0.353553385 : f32
    %34 = vector.broadcast %cst_27 : f32 to vector<8x8xf32>
    %35 = arith.mulf %29, %34 : vector<8x8xf32>
    %cst_28 = arith.constant dense<0.000000e+00> : vector<8x16xf32>
    %36 = tpu.matmul %35, %31, %cst_28 {dimension_numbers = #tpu.dot_dimension_numbers<[1], [1], [0], [0], [0, 0, 1, 0], [], []>} : vector<8x8xf32>, vector<16x8xf32>, vector<8x16xf32> -> vector<8x16xf32>
    %cst_29 = arith.constant dense<0xFF800000> : vector<8xf32>
    %37 = vector.multi_reduction <maximumf>, %36, %cst_29 [1] : vector<8x16xf32> to vector<8xf32>
    %38 = vector.shape_cast %37 : vector<8xf32> to vector<8x1xf32>
    %39 = vector.broadcast %38 : vector<8x1xf32> to vector<8x16xf32>
    %40 = arith.subf %36, %39 : vector<8x16xf32>
    %41 = math.exp %40 : vector<8x16xf32>
    %cst_30 = arith.constant dense<0.000000e+00> : vector<8xf32>
    %42 = vector.multi_reduction <add>, %41, %cst_30 [1] : vector<8x16xf32> to vector<8xf32>
    %43 = vector.shape_cast %42 : vector<8xf32> to vector<8x1xf32>
    %44 = tpu.reciprocal %43 : vector<8x1xf32> -> vector<8x1xf32>
    %cst_31 = arith.constant dense<0.000000e+00> : vector<8x8xf32>
    %45 = tpu.matmul %41, %33, %cst_31 {dimension_numbers = #tpu.dot_dimension_numbers<[1], [0], [0], [1], [0, 0, 1, 1], [], []>} : vector<8x16xf32>, vector<16x8xf32>, vector<8x8xf32> -> vector<8x8xf32>
    %46 = vector.broadcast %44 : vector<8x1xf32> to vector<8x8xf32>
    %47 = arith.mulf %45, %46 : vector<8x8xf32>
    %c0_32 = arith.constant 0 : index
    %c0_33 = arith.constant 0 : index
    %c8_34 = arith.constant 8 : index
    %48 = vector.load %arg6[%c0_32, %c0_33, %c8_34] : memref<1x8x32xf32, #tpu.memory_space<vmem>>, vector<1x8x8xf32>
    %49 = vector.shape_cast %48 : vector<1x8x8xf32> to vector<8x8xf32>
    %50 = vector.shape_cast %47 : vector<8x8xf32> to vector<1x8x8xf32>
    tpu.vector_store %arg6[%c0_32, %c0_33, %c8_34], %50 {strides = array<i32>} : memref<1x8x32xf32, #tpu.memory_space<vmem>>, vector<1x8x8xf32>,
    %51 = vector.broadcast %44 : vector<8x1xf32> to vector<8x16xf32>
    %52 = arith.mulf %41, %51 : vector<8x16xf32>
    %c0_35 = arith.constant 0 : index
    %c1 = arith.constant 1 : index
    %c0_36 = arith.constant 0 : index
    %c0_37 = arith.constant 0 : index
    %53 = vector.load %arg7[%c0_35, %c1, %c0_36, %c0_37] : memref<1x4x8x16xf32, #tpu.memory_space<vmem>>, vector<1x1x8x16xf32>
    %54 = vector.shape_cast %53 : vector<1x1x8x16xf32> to vector<8x16xf32>
    %55 = vector.shape_cast %52 : vector<8x16xf32> to vector<1x1x8x16xf32>
    tpu.vector_store %arg7[%c0_35, %c1, %c0_36, %c0_37], %55 {strides = array<i32>} : memref<1x4x8x16xf32, #tpu.memory_space<vmem>>, vector<1x1x8x16xf32>,
    %c0_38 = arith.constant 0 : index
    %c0_39 = arith.constant 0 : index
    %c16 = arith.constant 16 : index
    %56 = vector.load %arg3[%c0_38, %c0_39, %c16] : memref<1x8x32xf32, #tpu.memory_space<vmem>>, vector<1x8x8xf32>
    %57 = vector.shape_cast %56 : vector<1x8x8xf32> to vector<8x8xf32>
    %c0_40 = arith.constant 0 : index
    %c0_41 = arith.constant 0 : index
    %c16_42 = arith.constant 16 : index
    %58 = vector.load %arg4[%c0_40, %c0_41, %c16_42] : memref<1x16x32xf32, #tpu.memory_space<vmem>>, vector<1x16x8xf32>
    %59 = vector.shape_cast %58 : vector<1x16x8xf32> to vector<16x8xf32>
    %c0_43 = arith.constant 0 : index
    %c0_44 = arith.constant 0 : index
    %c16_45 = arith.constant 16 : index
    %60 = vector.load %arg5[%c0_43, %c0_44, %c16_45] : memref<1x16x32xf32, #tpu.memory_space<vmem>>, vector<1x16x8xf32>
    %61 = vector.shape_cast %60 : vector<1x16x8xf32> to vector<16x8xf32>
    %cst_46 = arith.constant 0.353553385 : f32
    %62 = vector.broadcast %cst_46 : f32 to vector<8x8xf32>
    %63 = arith.mulf %57, %62 : vector<8x8xf32>
    %cst_47 = arith.constant dense<0.000000e+00> : vector<8x16xf32>
    %64 = tpu.matmul %63, %59, %cst_47 {dimension_numbers = #tpu.dot_dimension_numbers<[1], [1], [0], [0], [0, 0, 1, 0], [], []>} : vector<8x8xf32>, vector<16x8xf32>, vector<8x16xf32> -> vector<8x16xf32>
    %cst_48 = arith.constant dense<0xFF800000> : vector<8xf32>
    %65 = vector.multi_reduction <maximumf>, %64, %cst_48 [1] : vector<8x16xf32> to vector<8xf32>
    %66 = vector.shape_cast %65 : vector<8xf32> to vector<8x1xf32>
    %67 = vector.broadcast %66 : vector<8x1xf32> to vector<8x16xf32>
    %68 = arith.subf %64, %67 : vector<8x16xf32>
    %69 = math.exp %68 : vector<8x16xf32>
    %cst_49 = arith.constant dense<0.000000e+00> : vector<8xf32>
    %70 = vector.multi_reduction <add>, %69, %cst_49 [1] : vector<8x16xf32> to vector<8xf32>
    %71 = vector.shape_cast %70 : vector<8xf32> to vector<8x1xf32>
    %72 = tpu.reciprocal %71 : vector<8x1xf32> -> vector<8x1xf32>
    %cst_50 = arith.constant dense<0.000000e+00> : vector<8x8xf32>
    %73 = tpu.matmul %69, %61, %cst_50 {dimension_numbers = #tpu.dot_dimension_numbers<[1], [0], [0], [1], [0, 0, 1, 1], [], []>} : vector<8x16xf32>, vector<16x8xf32>, vector<8x8xf32> -> vector<8x8xf32>
    %74 = vector.broadcast %72 : vector<8x1xf32> to vector<8x8xf32>
    %75 = arith.mulf %73, %74 : vector<8x8xf32>
    %c0_51 = arith.constant 0 : index
    %c0_52 = arith.constant 0 : index
    %c16_53 = arith.constant 16 : index
    %76 = vector.load %arg6[%c0_51, %c0_52, %c16_53] : memref<1x8x32xf32, #tpu.memory_space<vmem>>, vector<1x8x8xf32>
    %77 = vector.shape_cast %76 : vector<1x8x8xf32> to vector<8x8xf32>
    %78 = vector.shape_cast %75 : vector<8x8xf32> to vector<1x8x8xf32>
    tpu.vector_store %arg6[%c0_51, %c0_52, %c16_53], %78 {strides = array<i32>} : memref<1x8x32xf32, #tpu.memory_space<vmem>>, vector<1x8x8xf32>,
    %79 = vector.broadcast %72 : vector<8x1xf32> to vector<8x16xf32>
    %80 = arith.mulf %69, %79 : vector<8x16xf32>
    %c0_54 = arith.constant 0 : index
    %c2 = arith.constant 2 : index
    %c0_55 = arith.constant 0 : index
    %c0_56 = arith.constant 0 : index
    %81 = vector.load %arg7[%c0_54, %c2, %c0_55, %c0_56] : memref<1x4x8x16xf32, #tpu.memory_space<vmem>>, vector<1x1x8x16xf32>
    %82 = vector.shape_cast %81 : vector<1x1x8x16xf32> to vector<8x16xf32>
    %83 = vector.shape_cast %80 : vector<8x16xf32> to vector<1x1x8x16xf32>
    tpu.vector_store %arg7[%c0_54, %c2, %c0_55, %c0_56], %83 {strides = array<i32>} : memref<1x4x8x16xf32, #tpu.memory_space<vmem>>, vector<1x1x8x16xf32>,
    %c0_57 = arith.constant 0 : index
    %c0_58 = arith.constant 0 : index
    %c24 = arith.constant 24 : index
    %84 = vector.load %arg3[%c0_57, %c0_58, %c24] : memref<1x8x32xf32, #tpu.memory_space<vmem>>, vector<1x8x8xf32>
    %85 = vector.shape_cast %84 : vector<1x8x8xf32> to vector<8x8xf32>
    %c0_59 = arith.constant 0 : index
    %c0_60 = arith.constant 0 : index
    %c24_61 = arith.constant 24 : index
    %86 = vector.load %arg4[%c0_59, %c0_60, %c24_61] : memref<1x16x32xf32, #tpu.memory_space<vmem>>, vector<1x16x8xf32>
    %87 = vector.shape_cast %86 : vector<1x16x8xf32> to vector<16x8xf32>
    %c0_62 = arith.constant 0 : index
    %c0_63 = arith.constant 0 : index
    %c24_64 = arith.constant 24 : index
    %88 = vector.load %arg5[%c0_62, %c0_63, %c24_64] : memref<1x16x32xf32, #tpu.memory_space<vmem>>, vector<1x16x8xf32>
    %89 = vector.shape_cast %88 : vector<1x16x8xf32> to vector<16x8xf32>
    %cst_65 = arith.constant 0.353553385 : f32
    %90 = vector.broadcast %cst_65 : f32 to vector<8x8xf32>
    %91 = arith.mulf %85, %90 : vector<8x8xf32>
    %cst_66 = arith.constant dense<0.000000e+00> : vector<8x16xf32>
    %92 = tpu.matmul %91, %87, %cst_66 {dimension_numbers = #tpu.dot_dimension_numbers<[1], [1], [0], [0], [0, 0, 1, 0], [], []>} : vector<8x8xf32>, vector<16x8xf32>, vector<8x16xf32> -> vector<8x16xf32>
    %cst_67 = arith.constant dense<0xFF800000> : vector<8xf32>
    %93 = vector.multi_reduction <maximumf>, %92, %cst_67 [1] : vector<8x16xf32> to vector<8xf32>
    %94 = vector.shape_cast %93 : vector<8xf32> to vector<8x1xf32>
    %95 = vector.broadcast %94 : vector<8x1xf32> to vector<8x16xf32>
    %96 = arith.subf %92, %95 : vector<8x16xf32>
    %97 = math.exp %96 : vector<8x16xf32>
    %cst_68 = arith.constant dense<0.000000e+00> : vector<8xf32>
    %98 = vector.multi_reduction <add>, %97, %cst_68 [1] : vector<8x16xf32> to vector<8xf32>
    %99 = vector.shape_cast %98 : vector<8xf32> to vector<8x1xf32>
    %100 = tpu.reciprocal %99 : vector<8x1xf32> -> vector<8x1xf32>
    %cst_69 = arith.constant dense<0.000000e+00> : vector<8x8xf32>
    %101 = tpu.matmul %97, %89, %cst_69 {dimension_numbers = #tpu.dot_dimension_numbers<[1], [0], [0], [1], [0, 0, 1, 1], [], []>} : vector<8x16xf32>, vector<16x8xf32>, vector<8x8xf32> -> vector<8x8xf32>
    %102 = vector.broadcast %100 : vector<8x1xf32> to vector<8x8xf32>
    %103 = arith.mulf %101, %102 : vector<8x8xf32>
    %c0_70 = arith.constant 0 : index
    %c0_71 = arith.constant 0 : index
    %c24_72 = arith.constant 24 : index
    %104 = vector.load %arg6[%c0_70, %c0_71, %c24_72] : memref<1x8x32xf32, #tpu.memory_space<vmem>>, vector<1x8x8xf32>
    %105 = vector.shape_cast %104 : vector<1x8x8xf32> to vector<8x8xf32>
    %106 = vector.shape_cast %103 : vector<8x8xf32> to vector<1x8x8xf32>
    tpu.vector_store %arg6[%c0_70, %c0_71, %c24_72], %106 {strides = array<i32>} : memref<1x8x32xf32, #tpu.memory_space<vmem>>, vector<1x8x8xf32>,
    %107 = vector.broadcast %100 : vector<8x1xf32> to vector<8x16xf32>
    %108 = arith.mulf %97, %107 : vector<8x16xf32>
    %c0_73 = arith.constant 0 : index
    %c3 = arith.constant 3 : index
    %c0_74 = arith.constant 0 : index
    %c0_75 = arith.constant 0 : index
    %109 = vector.load %arg7[%c0_73, %c3, %c0_74, %c0_75] : memref<1x4x8x16xf32, #tpu.memory_space<vmem>>, vector<1x1x8x16xf32>
    %110 = vector.shape_cast %109 : vector<1x1x8x16xf32> to vector<8x16xf32>
    %111 = vector.shape_cast %108 : vector<8x16xf32> to vector<1x1x8x16xf32>
    tpu.vector_store %arg7[%c0_73, %c3, %c0_74, %c0_75], %111 {strides = array<i32>} : memref<1x4x8x16xf32, #tpu.memory_space<vmem>>, vector<1x1x8x16xf32>,
    return
  }
  func.func @transform_0(%arg0: i32, %arg1: i32, %arg2: i32) -> (i32, i32, i32) {
    %c0_i32 = arith.constant 0 : i32
    %0 = arith.addi %arg1, %c0_i32 : i32
    %c0_i32_0 = arith.constant 0 : i32
    return %arg0, %arg2, %0 : i32, i32, i32
  }
  func.func @transform_1(%arg0: i32, %arg1: i32, %arg2: i32) -> (i32, i32, i32) {
    %c0_i32 = arith.constant 0 : i32
    %0 = arith.addi %arg1, %c0_i32 : i32
    %c0_i32_0 = arith.constant 0 : i32
    %c0_i32_1 = arith.constant 0 : i32
    return %arg0, %c0_i32_0, %0 : i32, i32, i32
  }
  func.func @transform_2(%arg0: i32, %arg1: i32, %arg2: i32) -> (i32, i32, i32) {
    %c0_i32 = arith.constant 0 : i32
    %0 = arith.addi %arg1, %c0_i32 : i32
    %c0_i32_0 = arith.constant 0 : i32
    %c0_i32_1 = arith.constant 0 : i32
    return %arg0, %c0_i32_0, %0 : i32, i32, i32
  }
  func.func @transform_3(%arg0: i32, %arg1: i32, %arg2: i32) -> (i32, i32, i32) {
    %c0_i32 = arith.constant 0 : i32
    return %arg0, %arg2, %arg1 : i32, i32, i32
  }
  func.func @transform_4(%arg0: i32, %arg1: i32, %arg2: i32) -> (i32, i32, i32, i32) {
    %c0_i32 = arith.constant 0 : i32
    %c0_i32_0 = arith.constant 0 : i32
    return %arg0, %arg1, %arg2, %c0_i32 : i32, i32, i32, i32
  }
}

module attributes {stable_mosaic.version = 11 : i64} {
  func.func @_linear_kernel(%arg0: i32, %arg1: i32, %arg2: i32, %arg3: memref<16x32xf32, #tpu.memory_space<vmem>>, %arg4: memref<32x32xf32, #tpu.memory_space<vmem>>, %arg5: memref<1x32xf32, #tpu.memory_space<vmem>>, %arg6: memref<16x32xf32, #tpu.memory_space<vmem>>, %arg7: memref<16x32xf32, #tpu.memory_space<vmem>>) attributes {dimension_semantics = [#tpu.dimension_semantics<parallel>, #tpu.dimension_semantics<parallel>, #tpu.dimension_semantics<arbitrary>], iteration_bounds = array<i64: 1, 1, 1>, scalar_prefetch = 0 : i64, scratch_operands = 1 : i64, tpu.core_type = #tpu.core_type<tc>, window_params = [{transform_indices = @transform_0, window_bounds = array<i64: 16, 32>}, {transform_indices = @transform_1, window_bounds = array<i64: 32, 32>}, {transform_indices = @transform_2, window_bounds = array<i64: 1, 32>}, {transform_indices = @transform_3, window_bounds = array<i64: 16, 32>}]} {
    %c0_i32 = arith.constant 0 : i32
    %0 = arith.cmpi eq, %arg2, %c0_i32 : i32
    %1 = arith.extui %0 : i1 to i32
    %c0_i32_0 = arith.constant 0 : i32
    %2 = arith.cmpi ne, %1, %c0_i32_0 : i32
    scf.if %2 {
      %cst_10 = arith.constant 0.000000e+00 : f32
      %12 = vector.broadcast %cst_10 : f32 to vector<16x32xf32>
      %c0_11 = arith.constant 0 : index
      %c0_12 = arith.constant 0 : index
      %13 = vector.load %arg7[%c0_11, %c0_12] : memref<16x32xf32, #tpu.memory_space<vmem>>, vector<16x32xf32>
      tpu.vector_store %arg7[%c0_11, %c0_12], %12 {strides = array<i32>} : memref<16x32xf32, #tpu.memory_space<vmem>>, vector<16x32xf32>,
    } else {
    }
    %c0 = arith.constant 0 : index
    %c0_1 = arith.constant 0 : index
    %3 = vector.load %arg7[%c0, %c0_1] : memref<16x32xf32, #tpu.memory_space<vmem>>, vector<16x32xf32>
    %c0_2 = arith.constant 0 : index
    %c0_3 = arith.constant 0 : index
    %4 = vector.load %arg3[%c0_2, %c0_3] : memref<16x32xf32, #tpu.memory_space<vmem>>, vector<16x32xf32>
    %c0_4 = arith.constant 0 : index
    %c0_5 = arith.constant 0 : index
    %5 = vector.load %arg4[%c0_4, %c0_5] : memref<32x32xf32, #tpu.memory_space<vmem>>, vector<32x32xf32>
    %cst = arith.constant dense<0.000000e+00> : vector<16x32xf32>
    %6 = tpu.matmul %4, %5, %cst {dimension_numbers = #tpu.dot_dimension_numbers<[1], [0], [0], [1], [0, 0, 1, 1], [], []>} : vector<16x32xf32>, vector<32x32xf32>, vector<16x32xf32> -> vector<16x32xf32>
    %7 = arith.addf %3, %6 : vector<16x32xf32>
    %c0_6 = arith.constant 0 : index
    %c0_7 = arith.constant 0 : index
    %8 = vector.load %arg7[%c0_6, %c0_7] : memref<16x32xf32, #tpu.memory_space<vmem>>, vector<16x32xf32>
    tpu.vector_store %arg7[%c0_6, %c0_7], %7 {strides = array<i32>} : memref<16x32xf32, #tpu.memory_space<vmem>>, vector<16x32xf32>,
    %c0_i32_8 = arith.constant 0 : i32
    %9 = arith.cmpi eq, %arg2, %c0_i32_8 : i32
    %10 = arith.extui %9 : i1 to i32
    %c0_i32_9 = arith.constant 0 : i32
    %11 = arith.cmpi ne, %10, %c0_i32_9 : i32
    scf.if %11 {
      %c0_10 = arith.constant 0 : index
      %c0_11 = arith.constant 0 : index
      %12 = vector.load %arg7[%c0_10, %c0_11] : memref<16x32xf32, #tpu.memory_space<vmem>>, vector<16x32xf32>
      %c0_12 = arith.constant 0 : index
      %c0_13 = arith.constant 0 : index
      %13 = vector.load %arg5[%c0_12, %c0_13] : memref<1x32xf32, #tpu.memory_space<vmem>>, vector<1x32xf32>
      %14 = vector.broadcast %13 : vector<1x32xf32> to vector<16x32xf32>
      %15 = arith.addf %12, %14 : vector<16x32xf32>
      %c0_14 = arith.constant 0 : index
      %c0_15 = arith.constant 0 : index
      %16 = vector.load %arg6[%c0_14, %c0_15] : memref<16x32xf32, #tpu.memory_space<vmem>>, vector<16x32xf32>
      tpu.vector_store %arg6[%c0_14, %c0_15], %15 {strides = array<i32>} : memref<16x32xf32, #tpu.memory_space<vmem>>, vector<16x32xf32>,
    } else {
    }
    return
  }
  func.func @transform_0(%arg0: i32, %arg1: i32, %arg2: i32) -> (i32, i32) {
    %c0_i32 = arith.constant 0 : i32
    return %arg0, %arg2 : i32, i32
  }
  func.func @transform_1(%arg0: i32, %arg1: i32, %arg2: i32) -> (i32, i32) {
    %c0_i32 = arith.constant 0 : i32
    return %arg2, %arg1 : i32, i32
  }
  func.func @transform_2(%arg0: i32, %arg1: i32, %arg2: i32) -> (i32, i32) {
    %c0_i32 = arith.constant 0 : i32
    %c0_i32_0 = arith.constant 0 : i32
    return %c0_i32, %arg1 : i32, i32
  }
  func.func @transform_3(%arg0: i32, %arg1: i32, %arg2: i32) -> (i32, i32) {
    %c0_i32 = arith.constant 0 : i32
    return %arg0, %arg1 : i32, i32
  }
}

module attributes {stable_mosaic.version = 11 : i64} {
  func.func @_linear_kernel(%arg0: i32, %arg1: i32, %arg2: i32, %arg3: memref<16x32xf32, #tpu.memory_space<vmem>>, %arg4: memref<32x32xf32, #tpu.memory_space<vmem>>, %arg5: memref<1x32xf32, #tpu.memory_space<vmem>>, %arg6: memref<16x32xf32, #tpu.memory_space<vmem>>, %arg7: memref<16x32xf32, #tpu.memory_space<vmem>>) attributes {dimension_semantics = [#tpu.dimension_semantics<parallel>, #tpu.dimension_semantics<parallel>, #tpu.dimension_semantics<arbitrary>], iteration_bounds = array<i64: 1, 1, 1>, scalar_prefetch = 0 : i64, scratch_operands = 1 : i64, tpu.core_type = #tpu.core_type<tc>, window_params = [{transform_indices = @transform_0, window_bounds = array<i64: 16, 32>}, {transform_indices = @transform_1, window_bounds = array<i64: 32, 32>}, {transform_indices = @transform_2, window_bounds = array<i64: 1, 32>}, {transform_indices = @transform_3, window_bounds = array<i64: 16, 32>}]} {
    %c0_i32 = arith.constant 0 : i32
    %0 = arith.cmpi eq, %arg2, %c0_i32 : i32
    %1 = arith.extui %0 : i1 to i32
    %c0_i32_0 = arith.constant 0 : i32
    %2 = arith.cmpi ne, %1, %c0_i32_0 : i32
    scf.if %2 {
      %cst_10 = arith.constant 0.000000e+00 : f32
      %12 = vector.broadcast %cst_10 : f32 to vector<16x32xf32>
      %c0_11 = arith.constant 0 : index
      %c0_12 = arith.constant 0 : index
      %13 = vector.load %arg7[%c0_11, %c0_12] : memref<16x32xf32, #tpu.memory_space<vmem>>, vector<16x32xf32>
      tpu.vector_store %arg7[%c0_11, %c0_12], %12 {strides = array<i32>} : memref<16x32xf32, #tpu.memory_space<vmem>>, vector<16x32xf32>,
    } else {
    }
    %c0 = arith.constant 0 : index
    %c0_1 = arith.constant 0 : index
    %3 = vector.load %arg7[%c0, %c0_1] : memref<16x32xf32, #tpu.memory_space<vmem>>, vector<16x32xf32>
    %c0_2 = arith.constant 0 : index
    %c0_3 = arith.constant 0 : index
    %4 = vector.load %arg3[%c0_2, %c0_3] : memref<16x32xf32, #tpu.memory_space<vmem>>, vector<16x32xf32>
    %c0_4 = arith.constant 0 : index
    %c0_5 = arith.constant 0 : index
    %5 = vector.load %arg4[%c0_4, %c0_5] : memref<32x32xf32, #tpu.memory_space<vmem>>, vector<32x32xf32>
    %cst = arith.constant dense<0.000000e+00> : vector<16x32xf32>
    %6 = tpu.matmul %4, %5, %cst {dimension_numbers = #tpu.dot_dimension_numbers<[1], [0], [0], [1], [0, 0, 1, 1], [], []>} : vector<16x32xf32>, vector<32x32xf32>, vector<16x32xf32> -> vector<16x32xf32>
    %7 = arith.addf %3, %6 : vector<16x32xf32>
    %c0_6 = arith.constant 0 : index
    %c0_7 = arith.constant 0 : index
    %8 = vector.load %arg7[%c0_6, %c0_7] : memref<16x32xf32, #tpu.memory_space<vmem>>, vector<16x32xf32>
    tpu.vector_store %arg7[%c0_6, %c0_7], %7 {strides = array<i32>} : memref<16x32xf32, #tpu.memory_space<vmem>>, vector<16x32xf32>,
    %c0_i32_8 = arith.constant 0 : i32
    %9 = arith.cmpi eq, %arg2, %c0_i32_8 : i32
    %10 = arith.extui %9 : i1 to i32
    %c0_i32_9 = arith.constant 0 : i32
    %11 = arith.cmpi ne, %10, %c0_i32_9 : i32
    scf.if %11 {
      %c0_10 = arith.constant 0 : index
      %c0_11 = arith.constant 0 : index
      %12 = vector.load %arg7[%c0_10, %c0_11] : memref<16x32xf32, #tpu.memory_space<vmem>>, vector<16x32xf32>
      %c0_12 = arith.constant 0 : index
      %c0_13 = arith.constant 0 : index
      %13 = vector.load %arg5[%c0_12, %c0_13] : memref<1x32xf32, #tpu.memory_space<vmem>>, vector<1x32xf32>
      %14 = vector.broadcast %13 : vector<1x32xf32> to vector<16x32xf32>
      %15 = arith.addf %12, %14 : vector<16x32xf32>
      %c0_14 = arith.constant 0 : index
      %c0_15 = arith.constant 0 : index
      %16 = vector.load %arg6[%c0_14, %c0_15] : memref<16x32xf32, #tpu.memory_space<vmem>>, vector<16x32xf32>
      tpu.vector_store %arg6[%c0_14, %c0_15], %15 {strides = array<i32>} : memref<16x32xf32, #tpu.memory_space<vmem>>, vector<16x32xf32>,
    } else {
    }
    return
  }
  func.func @transform_0(%arg0: i32, %arg1: i32, %arg2: i32) -> (i32, i32) {
    %c0_i32 = arith.constant 0 : i32
    return %arg0, %arg2 : i32, i32
  }
  func.func @transform_1(%arg0: i32, %arg1: i32, %arg2: i32) -> (i32, i32) {
    %c0_i32 = arith.constant 0 : i32
    return %arg2, %arg1 : i32, i32
  }
  func.func @transform_2(%arg0: i32, %arg1: i32, %arg2: i32) -> (i32, i32) {
    %c0_i32 = arith.constant 0 : i32
    %c0_i32_0 = arith.constant 0 : i32
    return %c0_i32, %arg1 : i32, i32
  }
  func.func @transform_3(%arg0: i32, %arg1: i32, %arg2: i32) -> (i32, i32) {
    %c0_i32 = arith.constant 0 : i32
    return %arg0, %arg1 : i32, i32
  }
}

</mosaic_0001>

<llo_original>
// kernel: attention_layer_forward.5
$region0: #{attention_layer_forward.5}
  #allocation0 [shape = 'u32[]', space=smem, size = 0x4, offset = 0x4, fixed_abs, tag = 'smem constant byte address 0x4 - core index']
  #allocation1 [shape = 'u32[144,128]{1,0:T(1,128)}', space=vmem, size = 0x12000, scoped, tag = 'internal scratch']
  #allocation2 [shape = 'f32[16,32]{1,0:T(8,128)}', space=vmem, size = 0x2000, scoped, tag = 'scratch operand']
  %s0 = inlined_call_operand.vmem [shape: f32[16,32], index: 0, kind: input, shape index: {}]
  %s1 = inlined_call_operand.vmem [shape: f32[32,32], index: 1, kind: input, shape index: {}]
  %s2 = inlined_call_operand.vmem [shape: f32[1,32], index: 2, kind: input, shape index: {}]
  %s3 = inlined_call_operand.vmem [shape: f32[16,32], index: 3, kind: output, shape index: {}]
  %s4 = sld [smem:[#allocation0]]
  $region30: #{attention_layer_forward.5} parent=0
    _
  %s6 = ssub.s32 1, %s4
  %s7 = scalar_select 0, %s6, %s4
  // Predicated region
  $region2: #{attention_layer_forward.5} parent=0 // pred_check
    _
  $region3: #{attention_layer_forward.5} parent=0 // pred_check_branch
    %9 = sbr.rel (0) target = $region5
  $region4: #{attention_layer_forward.5} parent=0 // pred_region
    _
  $region5: #{attention_layer_forward.5} parent=0 // pred_fallthru
    _
  // Predicated region
  $region6: #{attention_layer_forward.5} parent=0 // pred_check
    _
  $region7: #{attention_layer_forward.5} parent=0 // pred_check_branch
    %11 = sbr.rel (0) target = $region9
  $region8: #{attention_layer_forward.5} parent=0 // pred_region
    _
  $region9: #{attention_layer_forward.5} parent=0 // pred_fallthru
    _
  // Predicated region
  $region10: #{attention_layer_forward.5} parent=0 // pred_check
    _
  $region11: #{attention_layer_forward.5} parent=0 // pred_check_branch
    %13 = sbr.rel (0) target = $region13
  $region12: #{attention_layer_forward.5} parent=0 // pred_region
    _
  $region13: #{attention_layer_forward.5} parent=0 // pred_fallthru
    _
  %p14 = scmp.eq.s32.totalorder 0, 0
  // Predicated region
  $region14: #{attention_layer_forward.5} parent=0 // pred_check
    %p15 = pneg %p14
  $region15: #{attention_layer_forward.5} parent=0 // pred_check_branch
    %17 = sbr.rel (%p15) target = $region17
  $region16: #{attention_layer_forward.5} parent=0 // pred_region
    %vm18 = vcmask 261120
    %19 = vst.msk [vmem:[#allocation2] sm:$0xff] %vm18, 0.0
    %20 = vst.msk [vmem:[#allocation2 + $0x8] sm:$0xff] %vm18, 0.0
  $region17: #{attention_layer_forward.5} parent=0 // pred_fallthru
    _
  %v21 = vld [vmem:[#allocation2] sm:$0xff]
  %v22 = vld [vmem:[#allocation2 + $0x8] sm:$0xff]
  %v23 = vld [vmem:[%s0] sm:$0xff]
  %v24 = vld [vmem:[%s0 + $0x8] sm:$0xff]
  %v25 = vld [vmem:[%s1] sm:$0xff]
  %v26 = vld [vmem:[%s1 + $0x8] sm:$0xff]
  %v27 = vld [vmem:[%s1 + $0x10] sm:$0xff]
  %v28 = vld [vmem:[%s1 + $0x18] sm:$0xff]
  %vm29 = vcmask 261120
  %v31 = vsel %vm29, %v23, 0
  %v34 = vsel %vm29, %v24, 0
  %36 = vmatprep.subr.mxu0 0.0
  %37 = vmatpush1.msra.mxu0 %v25
  %38 = vmatprep.subr.mxu0 0.0
  %39 = vmatpush1.msra.mxu0 %v26
  %40 = vmatprep.subr.mxu0 0.0
  %41 = vmatpush1.msra.mxu0 %v27
  %42 = vmatprep.subr.mxu0 0.0
  %43 = vmatpush1.msra.mxu0 %v28
  %44 = vmatprep.subr.mxu0 0.0
  %45 = vmatpush1.msra.mxu0 0.0
  %46 = vmatprep.subr.mxu0 0.0
  %47 = vmatpush1.msra.mxu0 0.0
  %48 = vmatprep.subr.mxu0 0.0
  %49 = vmatpush1.msra.mxu0 0.0
  %50 = vmatprep.subr.mxu0 0.0
  %51 = vmatpush1.msra.mxu0 0.0
  %52 = vmatprep.subr.mxu0 0.0
  %53 = vmatpush1.msra.mxu0 0.0
  %54 = vmatprep.subr.mxu0 0.0
  %55 = vmatpush1.msra.mxu0 0.0
  %56 = vmatprep.subr.mxu0 0.0
  %57 = vmatpush1.msra.mxu0 0.0
  %58 = vmatprep.subr.mxu0 0.0
  %59 = vmatpush1.msra.mxu0 0.0
  %60 = vmatprep.subr.mxu0 0.0
  %61 = vmatpush1.msra.mxu0 0.0
  %62 = vmatprep.subr.mxu0 0.0
  %63 = vmatpush1.msra.mxu0 0.0
  %64 = vmatprep.subr.mxu0 0.0
  %65 = vmatpush1.msra.mxu0 0.0
  %66 = vmatprep.subr.mxu0 0.0
  %67 = vmatpush1.msra.mxu0 0.0
  %68 = vmatprep.subr.mxu0 0.0
  %69 = vmatpush1.msra.mxu0 0.0
  %70 = vmatprep.subr.mxu0 0.0
  %71 = vmatpush1.msra.mxu0 0.0
  %72 = vmatprep.subr.mxu0 0.0
  %73 = vmatpush1.msra.mxu0 0.0
  %74 = vmatprep.subr.mxu0 0.0
  %75 = vmatpush1.msra.mxu0 0.0
  %76 = vmatprep.subr.mxu0 0.0
  %77 = vmatpush1.msra.mxu0 0.0
  %78 = vmatprep.subr.mxu0 0.0
  %79 = vmatpush1.msra.mxu0 0.0
  %80 = vmatprep.subr.mxu0 0.0
  %81 = vmatpush1.msra.mxu0 0.0
  %82 = vmatprep.subr.mxu0 0.0
  %83 = vmatpush1.msra.mxu0 0.0
  %84 = vmatprep.subr.mxu0 0.0
  %85 = vmatpush1.msra.mxu0 0.0
  %86 = vmatprep.subr.mxu0 0.0
  %87 = vmatpush1.msra.mxu0 0.0
  %88 = vmatprep.subr.mxu0 0.0
  %89 = vmatpush1.msra.mxu0 0.0
  %90 = vmatprep.subr.mxu0 0.0
  %91 = vmatpush1.msra.mxu0 0.0
  %92 = vmatprep.subr.mxu0 0.0
  %93 = vmatpush1.msra.mxu0 0.0
  %94 = vmatprep.subr.mxu0 0.0
  %95 = vmatpush1.msra.mxu0 0.0
  %96 = vmatprep.subr.mxu0 0.0
  %97 = vmatpush1.msra.mxu0 0.0
  %98 = vmatprep.subr.mxu0 0.0
  %99 = vmatpush1.msra.mxu0 0.0
  %100 = vmatprep.mubr.f32.mxu0 0.0
  %101 = vmatmul.mubr.f32.gmra.mrb[0].mxu0 %v31
  %v102 = vpop.f32.mrb[0].mxu0
  %v103 = vadd.f32 0.0, %v102
  %v104 = vpop.f32.mrb[0].mxu0
  %105 = vmatprep.mubr.f32.mxu0 0.0
  %106 = vmatmul.mubr.f32.gmra.mrb[0].mxu0 %v34
  %v107 = vpop.f32.mrb[0].mxu0
  %v108 = vadd.f32 0.0, %v107
  %v109 = vpop.f32.mrb[0].mxu0
  %110 = vdwg.mxu0
  %v111 = vadd.f32 %v21, %v103
  %v112 = vadd.f32 %v22, %v108
  %113 = vst.msk [vmem:[#allocation2] sm:$0xff] %vm29, %v111
  %114 = vst.msk [vmem:[#allocation2 + $0x8] sm:$0xff] %vm29, %v112
  // Predicated region
  $region18: #{attention_layer_forward.5} parent=0 // pred_check
    %p115 = pneg %p14
  $region19: #{attention_layer_forward.5} parent=0 // pred_check_branch
    %117 = sbr.rel (%p115) target = $region21
  $region20: #{attention_layer_forward.5} parent=0 // pred_region
    %v118 = vld [vmem:[#allocation2] sm:$0xff]
    %v119 = vld [vmem:[#allocation2 + $0x8] sm:$0xff]
    %v120 = vld [vmem:[%s2] sm:$0x1]
    %v122 = vlaneseq
    %v123 = vshrl.u32 %v122, 7
    %v124 = vsub.s32 0, %v123
    %v125 = vrot.slane %v120, %v124
    %v127 = vadd.f32 %v118, %v125
    %v128 = vadd.f32 %v119, %v125
    %129 = vst.msk [vmem:[%s3] sm:$0xff] %vm29, %v127
    %130 = vst.msk [vmem:[%s3 + $0x8] sm:$0xff] %vm29, %v128
  $region21: #{attention_layer_forward.5} parent=0 // pred_fallthru
    _
  // Predicated region
  $region22: #{attention_layer_forward.5} parent=0 // pred_check
    _
  $region23: #{attention_layer_forward.5} parent=0 // pred_check_branch
    %132 = sbr.rel (0) target = $region25
  $region24: #{attention_layer_forward.5} parent=0 // pred_region
    _
  $region25: #{attention_layer_forward.5} parent=0 // pred_fallthru
    _
  // Predicated region
  $region26: #{attention_layer_forward.5} parent=0 // pred_check
    _
  $region27: #{attention_layer_forward.5} parent=0 // pred_check_branch
    %134 = sbr.rel (0) target = $region29
  $region28: #{attention_layer_forward.5} parent=0 // pred_region
    _
  $region29: #{attention_layer_forward.5} parent=0 // pred_fallthru
    _

// kernel: attention_layer_forward.7
$region0: #{attention_layer_forward.7}
  #allocation0 [shape = 'u32[]', space=smem, size = 0x4, offset = 0x4, fixed_abs, tag = 'smem constant byte address 0x4 - core index']
  #allocation1 [shape = 'u32[144,128]{1,0:T(1,128)}', space=vmem, size = 0x12000, scoped, tag = 'internal scratch']
  #allocation2 [shape = 'f32[32,32]{1,0:T(8,128)}', space=vmem, size = 0x4000, scoped, tag = 'scratch operand']
  %s0 = inlined_call_operand.vmem [shape: f32[32,32], index: 0, kind: input, shape index: {}]
  %s1 = inlined_call_operand.vmem [shape: f32[32,32], index: 1, kind: input, shape index: {}]
  %s2 = inlined_call_operand.vmem [shape: f32[1,32], index: 2, kind: input, shape index: {}]
  %s3 = inlined_call_operand.vmem [shape: f32[32,32], index: 3, kind: output, shape index: {}]
  %s4 = sld [smem:[#allocation0]]
  $region30: #{attention_layer_forward.7} parent=0
    _
  %s6 = ssub.s32 1, %s4
  %s7 = scalar_select 0, %s6, %s4
  // Predicated region
  $region2: #{attention_layer_forward.7} parent=0 // pred_check
    _
  $region3: #{attention_layer_forward.7} parent=0 // pred_check_branch
    %9 = sbr.rel (0) target = $region5
  $region4: #{attention_layer_forward.7} parent=0 // pred_region
    _
  $region5: #{attention_layer_forward.7} parent=0 // pred_fallthru
    _
  // Predicated region
  $region6: #{attention_layer_forward.7} parent=0 // pred_check
    _
  $region7: #{attention_layer_forward.7} parent=0 // pred_check_branch
    %11 = sbr.rel (0) target = $region9
  $region8: #{attention_layer_forward.7} parent=0 // pred_region
    _
  $region9: #{attention_layer_forward.7} parent=0 // pred_fallthru
    _
  // Predicated region
  $region10: #{attention_layer_forward.7} parent=0 // pred_check
    _
  $region11: #{attention_layer_forward.7} parent=0 // pred_check_branch
    %13 = sbr.rel (0) target = $region13
  $region12: #{attention_layer_forward.7} parent=0 // pred_region
    _
  $region13: #{attention_layer_forward.7} parent=0 // pred_fallthru
    _
  %p14 = scmp.eq.s32.totalorder 0, 0
  // Predicated region
  $region14: #{attention_layer_forward.7} parent=0 // pred_check
    %p15 = pneg %p14
  $region15: #{attention_layer_forward.7} parent=0 // pred_check_branch
    %17 = sbr.rel (%p15) target = $region17
  $region16: #{attention_layer_forward.7} parent=0 // pred_region
    %vm18 = vcmask 261120
    %19 = vst.msk [vmem:[#allocation2] sm:$0xff] %vm18, 0.0
    %20 = vst.msk [vmem:[#allocation2 + $0x8] sm:$0xff] %vm18, 0.0
    %21 = vst.msk [vmem:[#allocation2 + $0x10] sm:$0xff] %vm18, 0.0
    %22 = vst.msk [vmem:[#allocation2 + $0x18] sm:$0xff] %vm18, 0.0
  $region17: #{attention_layer_forward.7} parent=0 // pred_fallthru
    _
  %v23 = vld [vmem:[#allocation2] sm:$0xff]
  %v24 = vld [vmem:[#allocation2 + $0x8] sm:$0xff]
  %v25 = vld [vmem:[#allocation2 + $0x10] sm:$0xff]
  %v26 = vld [vmem:[#allocation2 + $0x18] sm:$0xff]
  %v27 = vld [vmem:[%s0] sm:$0xff]
  %v28 = vld [vmem:[%s0 + $0x8] sm:$0xff]
  %v29 = vld [vmem:[%s0 + $0x10] sm:$0xff]
  %v30 = vld [vmem:[%s0 + $0x18] sm:$0xff]
  %v31 = vld [vmem:[%s1] sm:$0xff]
  %v32 = vld [vmem:[%s1 + $0x8] sm:$0xff]
  %v33 = vld [vmem:[%s1 + $0x10] sm:$0xff]
  %v34 = vld [vmem:[%s1 + $0x18] sm:$0xff]
  %vm35 = vcmask 261120
  %v37 = vsel %vm35, %v27, 0
  %v40 = vsel %vm35, %v28, 0
  %v43 = vsel %vm35, %v29, 0
  %v46 = vsel %vm35, %v30, 0
  %48 = vmatprep.subr.mxu0 0.0
  %49 = vmatpush1.msra.mxu0 %v31
  %50 = vmatprep.subr.mxu0 0.0
  %51 = vmatpush1.msra.mxu0 %v32
  %52 = vmatprep.subr.mxu0 0.0
  %53 = vmatpush1.msra.mxu0 %v33
  %54 = vmatprep.subr.mxu0 0.0
  %55 = vmatpush1.msra.mxu0 %v34
  %56 = vmatprep.subr.mxu0 0.0
  %57 = vmatpush1.msra.mxu0 0.0
  %58 = vmatprep.subr.mxu0 0.0
  %59 = vmatpush1.msra.mxu0 0.0
  %60 = vmatprep.subr.mxu0 0.0
  %61 = vmatpush1.msra.mxu0 0.0
  %62 = vmatprep.subr.mxu0 0.0
  %63 = vmatpush1.msra.mxu0 0.0
  %64 = vmatprep.subr.mxu0 0.0
  %65 = vmatpush1.msra.mxu0 0.0
  %66 = vmatprep.subr.mxu0 0.0
  %67 = vmatpush1.msra.mxu0 0.0
  %68 = vmatprep.subr.mxu0 0.0
  %69 = vmatpush1.msra.mxu0 0.0
  %70 = vmatprep.subr.mxu0 0.0
  %71 = vmatpush1.msra.mxu0 0.0
  %72 = vmatprep.subr.mxu0 0.0
  %73 = vmatpush1.msra.mxu0 0.0
  %74 = vmatprep.subr.mxu0 0.0
  %75 = vmatpush1.msra.mxu0 0.0
  %76 = vmatprep.subr.mxu0 0.0
  %77 = vmatpush1.msra.mxu0 0.0
  %78 = vmatprep.subr.mxu0 0.0
  %79 = vmatpush1.msra.mxu0 0.0
  %80 = vmatprep.subr.mxu0 0.0
  %81 = vmatpush1.msra.mxu0 0.0
  %82 = vmatprep.subr.mxu0 0.0
  %83 = vmatpush1.msra.mxu0 0.0
  %84 = vmatprep.subr.mxu0 0.0
  %85 = vmatpush1.msra.mxu0 0.0
  %86 = vmatprep.subr.mxu0 0.0
  %87 = vmatpush1.msra.mxu0 0.0
  %88 = vmatprep.subr.mxu0 0.0
  %89 = vmatpush1.msra.mxu0 0.0
  %90 = vmatprep.subr.mxu0 0.0
  %91 = vmatpush1.msra.mxu0 0.0
  %92 = vmatprep.subr.mxu0 0.0
  %93 = vmatpush1.msra.mxu0 0.0
  %94 = vmatprep.subr.mxu0 0.0
  %95 = vmatpush1.msra.mxu0 0.0
  %96 = vmatprep.subr.mxu0 0.0
  %97 = vmatpush1.msra.mxu0 0.0
  %98 = vmatprep.subr.mxu0 0.0
  %99 = vmatpush1.msra.mxu0 0.0
  %100 = vmatprep.subr.mxu0 0.0
  %101 = vmatpush1.msra.mxu0 0.0
  %102 = vmatprep.subr.mxu0 0.0
  %103 = vmatpush1.msra.mxu0 0.0
  %104 = vmatprep.subr.mxu0 0.0
  %105 = vmatpush1.msra.mxu0 0.0
  %106 = vmatprep.subr.mxu0 0.0
  %107 = vmatpush1.msra.mxu0 0.0
  %108 = vmatprep.subr.mxu0 0.0
  %109 = vmatpush1.msra.mxu0 0.0
  %110 = vmatprep.subr.mxu0 0.0
  %111 = vmatpush1.msra.mxu0 0.0
  %112 = vmatprep.mubr.f32.mxu0 0.0
  %113 = vmatmul.mubr.f32.gmra.mrb[0].mxu0 %v37
  %v114 = vpop.f32.mrb[0].mxu0
  %v115 = vadd.f32 0.0, %v114
  %v116 = vpop.f32.mrb[0].mxu0
  %117 = vmatprep.mubr.f32.mxu0 0.0
  %118 = vmatmul.mubr.f32.gmra.mrb[0].mxu0 %v40
  %v119 = vpop.f32.mrb[0].mxu0
  %v120 = vadd.f32 0.0, %v119
  %v121 = vpop.f32.mrb[0].mxu0
  %122 = vmatprep.mubr.f32.mxu0 0.0
  %123 = vmatmul.mubr.f32.gmra.mrb[0].mxu0 %v43
  %v124 = vpop.f32.mrb[0].mxu0
  %v125 = vadd.f32 0.0, %v124
  %v126 = vpop.f32.mrb[0].mxu0
  %127 = vmatprep.mubr.f32.mxu0 0.0
  %128 = vmatmul.mubr.f32.gmra.mrb[0].mxu0 %v46
  %v129 = vpop.f32.mrb[0].mxu0
  %v130 = vadd.f32 0.0, %v129
  %v131 = vpop.f32.mrb[0].mxu0
  %132 = vdwg.mxu0
  %v133 = vadd.f32 %v23, %v115
  %v134 = vadd.f32 %v24, %v120
  %v135 = vadd.f32 %v25, %v125
  %v136 = vadd.f32 %v26, %v130
  %137 = vst.msk [vmem:[#allocation2] sm:$0xff] %vm35, %v133
  %138 = vst.msk [vmem:[#allocation2 + $0x8] sm:$0xff] %vm35, %v134
  %139 = vst.msk [vmem:[#allocation2 + $0x10] sm:$0xff] %vm35, %v135
  %140 = vst.msk [vmem:[#allocation2 + $0x18] sm:$0xff] %vm35, %v136
  // Predicated region
  $region18: #{attention_layer_forward.7} parent=0 // pred_check
    %p141 = pneg %p14
  $region19: #{attention_layer_forward.7} parent=0 // pred_check_branch
    %143 = sbr.rel (%p141) target = $region21
  $region20: #{attention_layer_forward.7} parent=0 // pred_region
    %v144 = vld [vmem:[#allocation2] sm:$0xff]
    %v145 = vld [vmem:[#allocation2 + $0x8] sm:$0xff]
    %v146 = vld [vmem:[#allocation2 + $0x10] sm:$0xff]
    %v147 = vld [vmem:[#allocation2 + $0x18] sm:$0xff]
    %v148 = vld [vmem:[%s2] sm:$0x1]
    %v150 = vlaneseq
    %v151 = vshrl.u32 %v150, 7
    %v152 = vsub.s32 0, %v151
    %v153 = vrot.slane %v148, %v152
    %v155 = vadd.f32 %v144, %v153
    %v156 = vadd.f32 %v145, %v153
    %v157 = vadd.f32 %v146, %v153
    %v158 = vadd.f32 %v147, %v153
    %159 = vst.msk [vmem:[%s3] sm:$0xff] %vm35, %v155
    %160 = vst.msk [vmem:[%s3 + $0x8] sm:$0xff] %vm35, %v156
    %161 = vst.msk [vmem:[%s3 + $0x10] sm:$0xff] %vm35, %v157
    %162 = vst.msk [vmem:[%s3 + $0x18] sm:$0xff] %vm35, %v158
  $region21: #{attention_layer_forward.7} parent=0 // pred_fallthru
    _
  // Predicated region
  $region22: #{attention_layer_forward.7} parent=0 // pred_check
    _
  $region23: #{attention_layer_forward.7} parent=0 // pred_check_branch
    %164 = sbr.rel (0) target = $region25
  $region24: #{attention_layer_forward.7} parent=0 // pred_region
    _
  $region25: #{attention_layer_forward.7} parent=0 // pred_fallthru
    _
  // Predicated region
  $region26: #{attention_layer_forward.7} parent=0 // pred_check
    _
  $region27: #{attention_layer_forward.7} parent=0 // pred_check_branch
    %166 = sbr.rel (0) target = $region29
  $region28: #{attention_layer_forward.7} parent=0 // pred_region
    _
  $region29: #{attention_layer_forward.7} parent=0 // pred_fallthru
    _

// kernel: attention_layer_forward.8
$region0: #{attention_layer_forward.8}
  #allocation0 [shape = 'u32[]', space=smem, size = 0x4, offset = 0x4, fixed_abs, tag = 'smem constant byte address 0x4 - core index']
  #allocation1 [shape = 'u32[144,128]{1,0:T(1,128)}', space=vmem, size = 0x12000, scoped, tag = 'internal scratch']
  %s0 = inlined_call_operand.vmem [shape: f32[2,8,32], index: 0, kind: input, shape index: {}]
  %s1 = inlined_call_operand.vmem [shape: f32[2,16,32], index: 1, kind: input, shape index: {}]
  %s2 = inlined_call_operand.vmem [shape: f32[2,16,32], index: 2, kind: input, shape index: {}]
  %s3 = inlined_call_operand.vmem [shape: f32[2,8,32], index: 3, kind: output, shape index: {0}]
  %s4 = inlined_call_operand.hbm [shape: f32[2,4,8,16], index: 4, kind: output, shape index: {1}]
  %5 = xla_tuple %s3, %s4
  %s6 = sld [smem:[#allocation0]]
  $region53: #{attention_layer_forward.8} parent=0
    _
  %s8 = ssub.s32 1, %s6
  %s9 = scalar_select 0, %s8, %s6
  $region1: #{attention_layer_forward.8} parent=0
    #allocation2 [shape = 'u8[32768]{0}', space=vmem, size = 0x8000, scoped, tag = 'output window, operand 1']
    #allocation3 [shape = 's32[2]{0}', space=sflag, size = 0x8, scoped, tag = 'scoped memory for attention_layer_forward.8']
    %10 = vsyncpa [#allocation3], 0
    %s11 = scalar_lea.sflag [#allocation3], 1
    %12 = vsyncpa %s11, 0
    loop: start=0, step=1, limit=4
    $region2: #{attention_layer_forward.8} parent=1 // loop_pre_header
      _
    $region3: #{attention_layer_forward.8} parent=1 // loop_header
      %s14 = sphi 0, %s18
      %p15 = scmp.ge.s32.totalorder %s14, 4
      %s21 = sphi 0, %s40
      %s22 = sphi 0, %s36
      %s23 = sphi 0, %s32
      %s24 = sphi 0, %s21
      %s25 = sphi 0, %s22
      %s26 = sphi 0, %s23
      %s27 = sphi 0, %s24
      %s28 = sphi 0, %s25
      %s29 = sphi 0, %s26
      %s47 = sphi 0, %s49
      %s50 = sphi 0, %s47
      %s51 = sphi 0, %s50
      %s67 = sphi 0, %s51
      %s75 = sphi 0, %s77
      %s78 = sphi 0, %s75
      %s79 = sphi 0, %s78
      %s95 = sphi 0, %s79
      %s103 = sphi 0, %s105
      %s106 = sphi 0, %s103
      %s107 = sphi 0, %s106
      %s123 = sphi 0, %s107
      %s133 = sphi 0, %s135
      %s136 = sphi 0, %s133
      %s137 = sphi 0, %s136
      %s153 = sphi 0, %s137
      %s163 = sphi 0, %s165
      %s166 = sphi 0, %s163
      %s167 = sphi 0, %s166
      %s183 = sphi 0, %s167
    $region4: #{attention_layer_forward.8} parent=1 // loop_header_branch
      %17 = sbr.rel (%p15) target = $region8
    $region5: #{attention_layer_forward.8} parent=1 // loop_body
      %s19 = ssub.s32 %s14, 1
      %s20 = ssub.s32 %s14, 2
      %s30 = sadd.s32 1, %s23
      %p31 = scmp.ge.s32.totalorder %s30, 1
      %s32 = scalar_select %p31, 0, %s30
      %s33 = sadd.s32 1, %s22
      %s34 = scalar_select %p31, %s33, %s22
      %p35 = scmp.ge.s32.totalorder %s34, 1
      %s36 = scalar_select %p35, 0, %s34
      %s37 = sadd.s32 1, %s21
      %s38 = scalar_select %p35, %s37, %s21
      %p39 = scmp.ge.s32.totalorder %s38, 2
      %s40 = scalar_select %p39, 0, %s38
      %s41 = ssub.s32 %s21, %s40
      %s42 = ssub.s32 %s23, %s32
      %s43 = sor.u32 %s41, %s42
      %s44 = ssub.s32 %s22, %s36
      %s45 = sor.u32 %s43, %s44
      %p46 = scmp.eq.s32.totalorder %s45, 0
      %s48 = sadd.s32 %s47, 1
      %s49 = scalar_select %p46, %s47, %s48
      %p52 = pneg %p46
      %p53 = scmp.eq.s32.totalorder %s14, 1
      %p54 = por %p52, %p53
      %p55 = scmp.ne.s32.totalorder %s47, %s50
      %p56 = scmp.eq.s32.totalorder %s14, 0
      %p57 = por %p55, %p56
      %p58 = scmp.ne.s32.totalorder %s47, %s50
      %p59 = scmp.eq.s32.totalorder %s19, 1
      %p60 = por %p58, %p59
      %p61 = scmp.ne.s32.totalorder %s50, %s51
      %p62 = scmp.eq.s32.totalorder %s19, 0
      %p63 = por %p61, %p62
      %p64 = scmp.ne.s32.totalorder %s50, %s51
      %p65 = scmp.eq.s32.totalorder %s20, 1
      %p66 = por %p64, %p65
      %p68 = scmp.ne.s32.totalorder %s51, %s67
      %p69 = scmp.eq.s32.totalorder %s20, 0
      %p70 = por %p68, %p69
      %s71 = ssub.s32 %s21, %s40
      %s72 = ssub.s32 %s22, %s36
      %s73 = sor.u32 %s71, %s72
      %p74 = scmp.eq.s32.totalorder %s73, 0
      %s76 = sadd.s32 %s75, 1
      %s77 = scalar_select %p74, %s75, %s76
      %p80 = pneg %p74
      %p81 = scmp.eq.s32.totalorder %s14, 1
      %p82 = por %p80, %p81
      %p83 = scmp.ne.s32.totalorder %s75, %s78
      %p84 = scmp.eq.s32.totalorder %s14, 0
      %p85 = por %p83, %p84
      %p86 = scmp.ne.s32.totalorder %s75, %s78
      %p87 = scmp.eq.s32.totalorder %s19, 1
      %p88 = por %p86, %p87
      %p89 = scmp.ne.s32.totalorder %s78, %s79
      %p90 = scmp.eq.s32.totalorder %s19, 0
      %p91 = por %p89, %p90
      %p92 = scmp.ne.s32.totalorder %s78, %s79
      %p93 = scmp.eq.s32.totalorder %s20, 1
      %p94 = por %p92, %p93
      %p96 = scmp.ne.s32.totalorder %s79, %s95
      %p97 = scmp.eq.s32.totalorder %s20, 0
      %p98 = por %p96, %p97
      %s99 = ssub.s32 %s21, %s40
      %s100 = ssub.s32 %s22, %s36
      %s101 = sor.u32 %s99, %s100
      %p102 = scmp.eq.s32.totalorder %s101, 0
      %s104 = sadd.s32 %s103, 1
      %s105 = scalar_select %p102, %s103, %s104
      %p108 = pneg %p102
      %p109 = scmp.eq.s32.totalorder %s14, 1
      %p110 = por %p108, %p109
      %p111 = scmp.ne.s32.totalorder %s103, %s106
      %p112 = scmp.eq.s32.totalorder %s14, 0
      %p113 = por %p111, %p112
      %p114 = scmp.ne.s32.totalorder %s103, %s106
      %p115 = scmp.eq.s32.totalorder %s19, 1
      %p116 = por %p114, %p115
      %p117 = scmp.ne.s32.totalorder %s106, %s107
      %p118 = scmp.eq.s32.totalorder %s19, 0
      %p119 = por %p117, %p118
      %p120 = scmp.ne.s32.totalorder %s106, %s107
      %p121 = scmp.eq.s32.totalorder %s20, 1
      %p122 = por %p120, %p121
      %p124 = scmp.ne.s32.totalorder %s107, %s123
      %p125 = scmp.eq.s32.totalorder %s20, 0
      %p126 = por %p124, %p125
      %s127 = ssub.s32 %s21, %s40
      %s128 = ssub.s32 %s23, %s32
      %s129 = sor.u32 %s127, %s128
      %s130 = ssub.s32 %s22, %s36
      %s131 = sor.u32 %s129, %s130
      %p132 = scmp.eq.s32.totalorder %s131, 0
      %s134 = sadd.s32 %s133, 1
      %s135 = scalar_select %p132, %s133, %s134
      %p138 = pneg %p132
      %p139 = scmp.eq.s32.totalorder %s14, 1
      %p140 = por %p138, %p139
      %p141 = scmp.ne.s32.totalorder %s133, %s136
      %p142 = scmp.eq.s32.totalorder %s14, 0
      %p143 = por %p141, %p142
      %p144 = scmp.ne.s32.totalorder %s133, %s136
      %p145 = scmp.eq.s32.totalorder %s19, 1
      %p146 = por %p144, %p145
      %p147 = scmp.ne.s32.totalorder %s136, %s137
      %p148 = scmp.eq.s32.totalorder %s19, 0
      %p149 = por %p147, %p148
      %p150 = scmp.ne.s32.totalorder %s136, %s137
      %p151 = scmp.eq.s32.totalorder %s20, 1
      %p152 = por %p150, %p151
      %p154 = scmp.ne.s32.totalorder %s137, %s153
      %p155 = scmp.eq.s32.totalorder %s20, 0
      %p156 = por %p154, %p155
      %s157 = ssub.s32 %s21, %s40
      %s158 = ssub.s32 %s22, %s36
      %s159 = sor.u32 %s157, %s158
      %s160 = ssub.s32 %s23, %s32
      %s161 = sor.u32 %s159, %s160
      %p162 = scmp.eq.s32.totalorder %s161, 0
      %s164 = sadd.s32 %s163, 1
      %s165 = scalar_select %p162, %s163, %s164
      %p168 = pneg %p162
      %p169 = scmp.eq.s32.totalorder %s14, 1
      %p170 = por %p168, %p169
      %p171 = scmp.ne.s32.totalorder %s163, %s166
      %p172 = scmp.eq.s32.totalorder %s14, 0
      %p173 = por %p171, %p172
      %p174 = scmp.ne.s32.totalorder %s163, %s166
      %p175 = scmp.eq.s32.totalorder %s19, 1
      %p176 = por %p174, %p175
      %p177 = scmp.ne.s32.totalorder %s166, %s167
      %p178 = scmp.eq.s32.totalorder %s19, 0
      %p179 = por %p177, %p178
      %p180 = scmp.ne.s32.totalorder %s166, %s167
      %p181 = scmp.eq.s32.totalorder %s20, 1
      %p182 = por %p180, %p181
      %p184 = scmp.ne.s32.totalorder %s167, %s183
      %p185 = scmp.eq.s32.totalorder %s20, 0
      %p186 = por %p184, %p185
      %p187 = scmp.le.s32.totalorder 1, %s14
      %p188 = scmp.lt.s32.totalorder %s14, 3
      %p189 = pnand %p187, %p188
      %p190 = pneg %p189
      // Predicated region
      $region9: #{attention_layer_forward.8} parent=5 // pred_check
        _
      $region10: #{attention_layer_forward.8} parent=5 // pred_check_branch
        %192 = sbr.rel (%p189) target = $region12
      $region11: #{attention_layer_forward.8} parent=5 // pred_region
        %s193 = ssub.s32 %s14, 1
      $region12: #{attention_layer_forward.8} parent=5 // pred_fallthru
        _
      %p194 = scmp.lt.s32.totalorder %s14, 2
      // Predicated region
      $region13: #{attention_layer_forward.8} parent=5 // pred_check
        %p195 = pneg %p194
      $region14: #{attention_layer_forward.8} parent=5 // pred_check_branch
        %197 = sbr.rel (%p195) target = $region16
      $region15: #{attention_layer_forward.8} parent=5 // pred_region
        // Predicated region
        $region17: #{attention_layer_forward.8} parent=15 // pred_check
          %p198 = pneg %p57
        $region18: #{attention_layer_forward.8} parent=15 // pred_check_branch
          %200 = sbr.rel (%p198) target = $region20
        $region19: #{attention_layer_forward.8} parent=15 // pred_region
          %p201 = scmp.lt.s32.totalorder %s21, 1
          %s202 = scalar_select %p201, %s21, 1
          %p203 = scmp.lt.s32.totalorder %s23, 0
          %s204 = scalar_select %p203, %s23, 0
          %p205 = scmp.lt.s32.totalorder %s22, 0
          %s206 = scalar_select %p205, %s22, 0
          %s207 = sadd.s32 %s206, %s204
          %s208 = sadd.s32 %s207, %s202
          %s209 = smul.addr %s208, 8
          %s210 = scalar_lea.vmem %s0, %s209
        $region20: #{attention_layer_forward.8} parent=15 // pred_fallthru
          _
        // Predicated region
        $region21: #{attention_layer_forward.8} parent=15 // pred_check
          %p211 = pneg %p85
        $region22: #{attention_layer_forward.8} parent=15 // pred_check_branch
          %213 = sbr.rel (%p211) target = $region24
        $region23: #{attention_layer_forward.8} parent=15 // pred_region
          %p214 = scmp.lt.s32.totalorder %s21, 1
          %s215 = scalar_select %p214, %s21, 1
          %p216 = scmp.lt.s32.totalorder %s22, 0
          %s217 = scalar_select %p216, %s22, 0
          %s218 = smul.addr %s215, 2
          %s219 = sadd.s32 %s217, %s218
          %s220 = smul.addr %s219, 8
          %s221 = scalar_lea.vmem %s1, %s220
        $region24: #{attention_layer_forward.8} parent=15 // pred_fallthru
          _
        // Predicated region
        $region25: #{attention_layer_forward.8} parent=15 // pred_check
          %p222 = pneg %p113
        $region26: #{attention_layer_forward.8} parent=15 // pred_check_branch
          %224 = sbr.rel (%p222) target = $region28
        $region27: #{attention_layer_forward.8} parent=15 // pred_region
          %p225 = scmp.lt.s32.totalorder %s21, 1
          %s226 = scalar_select %p225, %s21, 1
          %p227 = scmp.lt.s32.totalorder %s22, 0
          %s228 = scalar_select %p227, %s22, 0
          %s229 = smul.addr %s226, 2
          %s230 = sadd.s32 %s228, %s229
          %s231 = smul.addr %s230, 8
          %s232 = scalar_lea.vmem %s2, %s231
        $region28: #{attention_layer_forward.8} parent=15 // pred_fallthru
          _
      $region16: #{attention_layer_forward.8} parent=5 // pred_fallthru
        _
      %p233 = scmp.le.s32.totalorder 1, %s14
      %p234 = scmp.lt.s32.totalorder %s14, 3
      %p235 = pnand %p233, %p234
      %p236 = pneg %p235
      // Predicated region
      $region29: #{attention_layer_forward.8} parent=5 // pred_check
        _
      $region30: #{attention_layer_forward.8} parent=5 // pred_check_branch
        %238 = sbr.rel (%p235) target = $region32
      $region31: #{attention_layer_forward.8} parent=5 // pred_region
        %s239 = ssub.s32 %s14, 1
        %p240 = scmp.lt.s32.totalorder %s24, 1
        %s241 = scalar_select %p240, %s24, 1
        %p242 = scmp.lt.s32.totalorder %s26, 0
        %s243 = scalar_select %p242, %s26, 0
        %p244 = scmp.lt.s32.totalorder %s25, 0
        %s245 = scalar_select %p244, %s25, 0
        %s246 = sadd.s32 %s245, %s243
        %s247 = sadd.s32 %s246, %s241
        %s248 = smul.addr %s247, 8
        %s249 = scalar_lea.vmem %s0, %s248
        %p250 = pneg %p63
        %p251 = pneg %p60
        %p252 = scmp.lt.s32.totalorder %s24, 1
        %s253 = scalar_select %p252, %s24, 1
        %p254 = scmp.lt.s32.totalorder %s25, 0
        %s255 = scalar_select %p254, %s25, 0
        %s256 = smul.addr %s253, 2
        %s257 = sadd.s32 %s255, %s256
        %s258 = smul.addr %s257, 8
        %s259 = scalar_lea.vmem %s1, %s258
        %p260 = pneg %p91
        %p261 = pneg %p88
        %p262 = scmp.lt.s32.totalorder %s24, 1
        %s263 = scalar_select %p262, %s24, 1
        %p264 = scmp.lt.s32.totalorder %s25, 0
        %s265 = scalar_select %p264, %s25, 0
        %s266 = smul.addr %s263, 2
        %s267 = sadd.s32 %s265, %s266
        %s268 = smul.addr %s267, 8
        %s269 = scalar_lea.vmem %s2, %s268
        %p270 = pneg %p119
        %p271 = pneg %p116
        %p272 = pneg %p149
        %p273 = pneg %p146
        %p274 = scmp.lt.s32.totalorder %s24, 1
        %s275 = scalar_select %p274, %s24, 1
        %p276 = scmp.lt.s32.totalorder %s26, 0
        %s277 = scalar_select %p276, %s26, 0
        %p278 = scmp.lt.s32.totalorder %s25, 0
        %s279 = scalar_select %p278, %s25, 0
        %s280 = sadd.s32 %s279, %s277
        %s281 = sadd.s32 %s280, %s275
        %s282 = smul.addr %s281, 8
        %s283 = scalar_lea.vmem %s3, %s282
        %p284 = pneg %p179
        %p285 = pneg %p176
        %s286 = sand.u32 %s166, 1
        %s287 = scalar_lea.sflag [#allocation3], %s286
        %s288 = sand.u32 %s166, 1
        %s289 = smul.addr %s288, 32
        %s290 = scalar_lea.vmem [#allocation2], %s289
        %p291 = scmp.lt.s32.totalorder %s24, 1
        %s292 = scalar_select %p291, %s24, 1
        %p293 = scmp.lt.s32.totalorder %s26, 0
        %s294 = scalar_select %p293, %s26, 0
        %p295 = scmp.lt.s32.totalorder %s25, 0
        %s296 = scalar_select %p295, %s25, 0
        %s297 = sadd.s32 %s296, %s294
        %s298 = sadd.s32 %s297, %s292
        %s299 = smul.addr %s298, 8
        %s300 = scalar_lea.vmem %s0, %s299
        %p301 = scmp.lt.s32.totalorder %s24, 1
        %s302 = scalar_select %p301, %s24, 1
        %p303 = scmp.lt.s32.totalorder %s25, 0
        %s304 = scalar_select %p303, %s25, 0
        %s305 = smul.addr %s302, 2
        %s306 = sadd.s32 %s304, %s305
        %s307 = smul.addr %s306, 8
        %s308 = scalar_lea.vmem %s1, %s307
        %p309 = scmp.lt.s32.totalorder %s24, 1
        %s310 = scalar_select %p309, %s24, 1
        %p311 = scmp.lt.s32.totalorder %s25, 0
        %s312 = scalar_select %p311, %s25, 0
        %s313 = smul.addr %s310, 2
        %s314 = sadd.s32 %s312, %s313
        %s315 = smul.addr %s314, 8
        %s316 = scalar_lea.vmem %s2, %s315
        %p317 = scmp.lt.s32.totalorder %s24, 1
        %s318 = scalar_select %p317, %s24, 1
        %p319 = scmp.lt.s32.totalorder %s26, 0
        %s320 = scalar_select %p319, %s26, 0
        %p321 = scmp.lt.s32.totalorder %s25, 0
        %s322 = scalar_select %p321, %s25, 0
        %s323 = sadd.s32 %s322, %s320
        %s324 = sadd.s32 %s323, %s318
        %s325 = smul.addr %s324, 8
        %s326 = scalar_lea.vmem %s3, %s325
        %s327 = smul.u32 4, %s25
        %v328 = vld [vmem:[%s300] sm:$0xff]
        %v329 = vld [vmem:[%s308] sm:$0xff]
        %v330 = vld [vmem:[%s308 + $0x8] sm:$0xff]
        %v331 = vld [vmem:[%s316] sm:$0xff]
        %v332 = vld [vmem:[%s316 + $0x8] sm:$0xff]
        %v333 = vmul.f32 %v328, 0.35355338
        %vm334 = vcmask 64512
        %v336 = vsel %vm334, %v333, 0
        %v339 = vsel %vm334, %v329, 0
        %v342 = vsel %vm334, %v330, 0
        %344 = vmatprep.subr.mxu0 0.0
        %345 = vmatpush1.xpose.msra.mxu0 %v339
        %346 = vmatprep.subr.mxu0 0.0
        %347 = vmatpush1.xpose.msra.mxu0 %v342
        %348 = vmatprep.subr.mxu0 0.0
        %349 = vmatpush1.xpose.msra.mxu0 0.0
        %350 = vmatprep.subr.mxu0 0.0
        %351 = vmatpush1.xpose.msra.mxu0 0.0
        %352 = vmatprep.subr.mxu0 0.0
        %353 = vmatpush1.xpose.msra.mxu0 0.0
        %354 = vmatprep.subr.mxu0 0.0
        %355 = vmatpush1.xpose.msra.mxu0 0.0
        %356 = vmatprep.subr.mxu0 0.0
        %357 = vmatpush1.xpose.msra.mxu0 0.0
        %358 = vmatprep.subr.mxu0 0.0
        %359 = vmatpush1.xpose.msra.mxu0 0.0
        %360 = vmatprep.subr.mxu0 0.0
        %361 = vmatpush1.xpose.msra.mxu0 0.0
        %362 = vmatprep.subr.mxu0 0.0
        %363 = vmatpush1.xpose.msra.mxu0 0.0
        %364 = vmatprep.subr.mxu0 0.0
        %365 = vmatpush1.xpose.msra.mxu0 0.0
        %366 = vmatprep.subr.mxu0 0.0
        %367 = vmatpush1.xpose.msra.mxu0 0.0
        %368 = vmatprep.subr.mxu0 0.0
        %369 = vmatpush1.xpose.msra.mxu0 0.0
        %370 = vmatprep.subr.mxu0 0.0
        %371 = vmatpush1.xpose.msra.mxu0 0.0
        %372 = vmatprep.subr.mxu0 0.0
        %373 = vmatpush1.xpose.msra.mxu0 0.0
        %374 = vmatprep.subr.mxu0 0.0
        %375 = vmatpush1.xpose.msra.mxu0 0.0
        %376 = vmatprep.subr.mxu0 0.0
        %377 = vmatpush1.xpose.msra.mxu0 0.0
        %378 = vmatprep.subr.mxu0 0.0
        %379 = vmatpush1.xpose.msra.mxu0 0.0
        %380 = vmatprep.subr.mxu0 0.0
        %381 = vmatpush1.xpose.msra.mxu0 0.0
        %382 = vmatprep.subr.mxu0 0.0
        %383 = vmatpush1.xpose.msra.mxu0 0.0
        %384 = vmatprep.subr.mxu0 0.0
        %385 = vmatpush1.xpose.msra.mxu0 0.0
        %386 = vmatprep.subr.mxu0 0.0
        %387 = vmatpush1.xpose.msra.mxu0 0.0
        %388 = vmatprep.subr.mxu0 0.0
        %389 = vmatpush1.xpose.msra.mxu0 0.0
        %390 = vmatprep.subr.mxu0 0.0
        %391 = vmatpush1.xpose.msra.mxu0 0.0
        %392 = vmatprep.subr.mxu0 0.0
        %393 = vmatpush1.xpose.msra.mxu0 0.0
        %394 = vmatprep.subr.mxu0 0.0
        %395 = vmatpush1.xpose.msra.mxu0 0.0
        %396 = vmatprep.subr.mxu0 0.0
        %397 = vmatpush1.xpose.msra.mxu0 0.0
        %398 = vmatprep.subr.mxu0 0.0
        %399 = vmatpush1.xpose.msra.mxu0 0.0
        %400 = vmatprep.subr.mxu0 0.0
        %401 = vmatpush1.xpose.msra.mxu0 0.0
        %402 = vmatprep.subr.mxu0 0.0
        %403 = vmatpush1.xpose.msra.mxu0 0.0
        %404 = vmatprep.subr.mxu0 0.0
        %405 = vmatpush1.xpose.msra.mxu0 0.0
        %406 = vmatprep.subr.mxu0 0.0
        %407 = vmatpush1.xpose.msra.mxu0 0.0
        %408 = vmatprep.mubr.f32.mxu0 0.0
        %409 = vmatmul.mubr.f32.gmra.mrb[0].mxu0 %v336
        %v410 = vpop.f32.mrb[0].mxu0
        %v411 = vadd.f32 0.0, %v410
        %v412 = vpop.f32.mrb[0].mxu0
        %413 = vdwg.mxu0
        %vm414 = vcmask 130048
        %v415 = vsel %vm414, %v411, -inf
        %416 = vmax.xlane.f32.xlu0 %v415
        %v417 = vpop.xlane.xlu0 %416
        %v418 = vsub.f32 %v411, %v417
        %v419 = vmul.f32 %v418, 1.442695
        %v420 = vpow.pop %v419
        %v421 = vsel %vm414, %v420, 0.0
        %422 = vadd.xlane.f32.xlu0 %v421
        %v423 = vpop.xlane.xlu0 %422
        %v424 = vrcp.pop %v423
        %v426 = vsel %vm414, %v420, 0
        %428 = vmatprep.subr.mxu0 0.0
        %429 = vmatpush1.msra.mxu0 %v331
        %430 = vmatprep.subr.mxu0 0.0
        %431 = vmatpush1.msra.mxu0 %v332
        %432 = vmatprep.subr.mxu0 0.0
        %433 = vmatpush1.msra.mxu0 0.0
        %434 = vmatprep.subr.mxu0 0.0
        %435 = vmatpush1.msra.mxu0 0.0
        %436 = vmatprep.subr.mxu0 0.0
        %437 = vmatpush1.msra.mxu0 0.0
        %438 = vmatprep.subr.mxu0 0.0
        %439 = vmatpush1.msra.mxu0 0.0
        %440 = vmatprep.subr.mxu0 0.0
        %441 = vmatpush1.msra.mxu0 0.0
        %442 = vmatprep.subr.mxu0 0.0
        %443 = vmatpush1.msra.mxu0 0.0
        %444 = vmatprep.subr.mxu0 0.0
        %445 = vmatpush1.msra.mxu0 0.0
        %446 = vmatprep.subr.mxu0 0.0
        %447 = vmatpush1.msra.mxu0 0.0
        %448 = vmatprep.subr.mxu0 0.0
        %449 = vmatpush1.msra.mxu0 0.0
        %450 = vmatprep.subr.mxu0 0.0
        %451 = vmatpush1.msra.mxu0 0.0
        %452 = vmatprep.subr.mxu0 0.0
        %453 = vmatpush1.msra.mxu0 0.0
        %454 = vmatprep.subr.mxu0 0.0
        %455 = vmatpush1.msra.mxu0 0.0
        %456 = vmatprep.subr.mxu0 0.0
        %457 = vmatpush1.msra.mxu0 0.0
        %458 = vmatprep.subr.mxu0 0.0
        %459 = vmatpush1.msra.mxu0 0.0
        %460 = vmatprep.subr.mxu0 0.0
        %461 = vmatpush1.msra.mxu0 0.0
        %462 = vmatprep.subr.mxu0 0.0
        %463 = vmatpush1.msra.mxu0 0.0
        %464 = vmatprep.subr.mxu0 0.0
        %465 = vmatpush1.msra.mxu0 0.0
        %466 = vmatprep.subr.mxu0 0.0
        %467 = vmatpush1.msra.mxu0 0.0
        %468 = vmatprep.subr.mxu0 0.0
        %469 = vmatpush1.msra.mxu0 0.0
        %470 = vmatprep.subr.mxu0 0.0
        %471 = vmatpush1.msra.mxu0 0.0
        %472 = vmatprep.subr.mxu0 0.0
        %473 = vmatpush1.msra.mxu0 0.0
        %474 = vmatprep.subr.mxu0 0.0
        %475 = vmatpush1.msra.mxu0 0.0
        %476 = vmatprep.subr.mxu0 0.0
        %477 = vmatpush1.msra.mxu0 0.0
        %478 = vmatprep.subr.mxu0 0.0
        %479 = vmatpush1.msra.mxu0 0.0
        %480 = vmatprep.subr.mxu0 0.0
        %481 = vmatpush1.msra.mxu0 0.0
        %482 = vmatprep.subr.mxu0 0.0
        %483 = vmatpush1.msra.mxu0 0.0
        %484 = vmatprep.subr.mxu0 0.0
        %485 = vmatpush1.msra.mxu0 0.0
        %486 = vmatprep.subr.mxu0 0.0
        %487 = vmatpush1.msra.mxu0 0.0
        %488 = vmatprep.subr.mxu0 0.0
        %489 = vmatpush1.msra.mxu0 0.0
        %490 = vmatprep.subr.mxu0 0.0
        %491 = vmatpush1.msra.mxu0 0.0
        %492 = vmatprep.mubr.f32.mxu0 0.0
        %493 = vmatmul.mubr.f32.gmra.mrb[0].mxu0 %v426
        %v494 = vpop.f32.mrb[0].mxu0
        %v495 = vadd.f32 0.0, %v494
        %v496 = vpop.f32.mrb[0].mxu0
        %497 = vdwg.mxu0
        %v498 = vmul.f32 %v495, %v424
        %499 = vst.msk [vmem:[%s326] sm:$0xff] %vm334, %v498
        %v500 = vmul.f32 %v420, %v424
        %501 = vst.msk [vmem:[%s290] sm:$0xff] %vm414, %v500
        %v502 = vld [vmem:[%s300] sm:$0xff]
        %v503 = vld [vmem:[%s308] sm:$0xff]
        %v504 = vld [vmem:[%s308 + $0x8] sm:$0xff]
        %v505 = vld [vmem:[%s316] sm:$0xff]
        %v506 = vld [vmem:[%s316 + $0x8] sm:$0xff]
        %v507 = vmul.f32 %v502, 0.35355338
        %509 = vrot.lane.b32.xlu0 %v507, 120
        %v510 = vpop.permute.xlu0 %509
        %513 = vrot.lane.b32.xlu0 %v503, 120
        %v514 = vpop.permute.xlu0 %513
        %515 = vrot.lane.b32.xlu0 %v504, 120
        %v516 = vpop.permute.xlu0 %515
        %v517 = vsel %vm334, %v510, 0
        %v519 = vsel %vm334, %v514, 0
        %v521 = vsel %vm334, %v516, 0
        %523 = vmatprep.subr.mxu0 0.0
        %524 = vmatpush1.xpose.msra.mxu0 %v519
        %525 = vmatprep.subr.mxu0 0.0
        %526 = vmatpush1.xpose.msra.mxu0 %v521
        %527 = vmatprep.subr.mxu0 0.0
        %528 = vmatpush1.xpose.msra.mxu0 0.0
        %529 = vmatprep.subr.mxu0 0.0
        %530 = vmatpush1.xpose.msra.mxu0 0.0
        %531 = vmatprep.subr.mxu0 0.0
        %532 = vmatpush1.xpose.msra.mxu0 0.0
        %533 = vmatprep.subr.mxu0 0.0
        %534 = vmatpush1.xpose.msra.mxu0 0.0
        %535 = vmatprep.subr.mxu0 0.0
        %536 = vmatpush1.xpose.msra.mxu0 0.0
        %537 = vmatprep.subr.mxu0 0.0
        %538 = vmatpush1.xpose.msra.mxu0 0.0
        %539 = vmatprep.subr.mxu0 0.0
        %540 = vmatpush1.xpose.msra.mxu0 0.0
        %541 = vmatprep.subr.mxu0 0.0
        %542 = vmatpush1.xpose.msra.mxu0 0.0
        %543 = vmatprep.subr.mxu0 0.0
        %544 = vmatpush1.xpose.msra.mxu0 0.0
        %545 = vmatprep.subr.mxu0 0.0
        %546 = vmatpush1.xpose.msra.mxu0 0.0
        %547 = vmatprep.subr.mxu0 0.0
        %548 = vmatpush1.xpose.msra.mxu0 0.0
        %549 = vmatprep.subr.mxu0 0.0
        %550 = vmatpush1.xpose.msra.mxu0 0.0
        %551 = vmatprep.subr.mxu0 0.0
        %552 = vmatpush1.xpose.msra.mxu0 0.0
        %553 = vmatprep.subr.mxu0 0.0
        %554 = vmatpush1.xpose.msra.mxu0 0.0
        %555 = vmatprep.subr.mxu0 0.0
        %556 = vmatpush1.xpose.msra.mxu0 0.0
        %557 = vmatprep.subr.mxu0 0.0
        %558 = vmatpush1.xpose.msra.mxu0 0.0
        %559 = vmatprep.subr.mxu0 0.0
        %560 = vmatpush1.xpose.msra.mxu0 0.0
        %561 = vmatprep.subr.mxu0 0.0
        %562 = vmatpush1.xpose.msra.mxu0 0.0
        %563 = vmatprep.subr.mxu0 0.0
        %564 = vmatpush1.xpose.msra.mxu0 0.0
        %565 = vmatprep.subr.mxu0 0.0
        %566 = vmatpush1.xpose.msra.mxu0 0.0
        %567 = vmatprep.subr.mxu0 0.0
        %568 = vmatpush1.xpose.msra.mxu0 0.0
        %569 = vmatprep.subr.mxu0 0.0
        %570 = vmatpush1.xpose.msra.mxu0 0.0
        %571 = vmatprep.subr.mxu0 0.0
        %572 = vmatpush1.xpose.msra.mxu0 0.0
        %573 = vmatprep.subr.mxu0 0.0
        %574 = vmatpush1.xpose.msra.mxu0 0.0
        %575 = vmatprep.subr.mxu0 0.0
        %576 = vmatpush1.xpose.msra.mxu0 0.0
        %577 = vmatprep.subr.mxu0 0.0
        %578 = vmatpush1.xpose.msra.mxu0 0.0
        %579 = vmatprep.subr.mxu0 0.0
        %580 = vmatpush1.xpose.msra.mxu0 0.0
        %581 = vmatprep.subr.mxu0 0.0
        %582 = vmatpush1.xpose.msra.mxu0 0.0
        %583 = vmatprep.subr.mxu0 0.0
        %584 = vmatpush1.xpose.msra.mxu0 0.0
        %585 = vmatprep.subr.mxu0 0.0
        %586 = vmatpush1.xpose.msra.mxu0 0.0
        %587 = vmatprep.mubr.f32.mxu0 0.0
        %588 = vmatmul.mubr.f32.gmra.mrb[0].mxu0 %v517
        %v589 = vpop.f32.mrb[0].mxu0
        %v590 = vadd.f32 0.0, %v589
        %v591 = vpop.f32.mrb[0].mxu0
        %592 = vdwg.mxu0
        %v593 = vsel %vm414, %v590, -inf
        %594 = vmax.xlane.f32.xlu0 %v593
        %v595 = vpop.xlane.xlu0 %594
        %v596 = vsub.f32 %v590, %v595
        %v597 = vmul.f32 %v596, 1.442695
        %v598 = vpow.pop %v597
        %v599 = vsel %vm414, %v598, 0.0
        %600 = vadd.xlane.f32.xlu0 %v599
        %v601 = vpop.xlane.xlu0 %600
        %v602 = vrcp.pop %v601
        %605 = vrot.lane.b32.xlu0 %v505, 120
        %v606 = vpop.permute.xlu0 %605
        %607 = vrot.lane.b32.xlu0 %v506, 120
        %v608 = vpop.permute.xlu0 %607
        %v612 = vsel %vm414, %v598, 0
        %614 = vmatprep.subr.mxu0 0.0
        %615 = vmatpush1.msra.mxu0 %v606
        %616 = vmatprep.subr.mxu0 0.0
        %617 = vmatpush1.msra.mxu0 %v608
        %618 = vmatprep.subr.mxu0 0.0
        %619 = vmatpush1.msra.mxu0 0.0
        %620 = vmatprep.subr.mxu0 0.0
        %621 = vmatpush1.msra.mxu0 0.0
        %622 = vmatprep.subr.mxu0 0.0
        %623 = vmatpush1.msra.mxu0 0.0
        %624 = vmatprep.subr.mxu0 0.0
        %625 = vmatpush1.msra.mxu0 0.0
        %626 = vmatprep.subr.mxu0 0.0
        %627 = vmatpush1.msra.mxu0 0.0
        %628 = vmatprep.subr.mxu0 0.0
        %629 = vmatpush1.msra.mxu0 0.0
        %630 = vmatprep.subr.mxu0 0.0
        %631 = vmatpush1.msra.mxu0 0.0
        %632 = vmatprep.subr.mxu0 0.0
        %633 = vmatpush1.msra.mxu0 0.0
        %634 = vmatprep.subr.mxu0 0.0
        %635 = vmatpush1.msra.mxu0 0.0
        %636 = vmatprep.subr.mxu0 0.0
        %637 = vmatpush1.msra.mxu0 0.0
        %638 = vmatprep.subr.mxu0 0.0
        %639 = vmatpush1.msra.mxu0 0.0
        %640 = vmatprep.subr.mxu0 0.0
        %641 = vmatpush1.msra.mxu0 0.0
        %642 = vmatprep.subr.mxu0 0.0
        %643 = vmatpush1.msra.mxu0 0.0
        %644 = vmatprep.subr.mxu0 0.0
        %645 = vmatpush1.msra.mxu0 0.0
        %646 = vmatprep.subr.mxu0 0.0
        %647 = vmatpush1.msra.mxu0 0.0
        %648 = vmatprep.subr.mxu0 0.0
        %649 = vmatpush1.msra.mxu0 0.0
        %650 = vmatprep.subr.mxu0 0.0
        %651 = vmatpush1.msra.mxu0 0.0
        %652 = vmatprep.subr.mxu0 0.0
        %653 = vmatpush1.msra.mxu0 0.0
        %654 = vmatprep.subr.mxu0 0.0
        %655 = vmatpush1.msra.mxu0 0.0
        %656 = vmatprep.subr.mxu0 0.0
        %657 = vmatpush1.msra.mxu0 0.0
        %658 = vmatprep.subr.mxu0 0.0
        %659 = vmatpush1.msra.mxu0 0.0
        %660 = vmatprep.subr.mxu0 0.0
        %661 = vmatpush1.msra.mxu0 0.0
        %662 = vmatprep.subr.mxu0 0.0
        %663 = vmatpush1.msra.mxu0 0.0
        %664 = vmatprep.subr.mxu0 0.0
        %665 = vmatpush1.msra.mxu0 0.0
        %666 = vmatprep.subr.mxu0 0.0
        %667 = vmatpush1.msra.mxu0 0.0
        %668 = vmatprep.subr.mxu0 0.0
        %669 = vmatpush1.msra.mxu0 0.0
        %670 = vmatprep.subr.mxu0 0.0
        %671 = vmatpush1.msra.mxu0 0.0
        %672 = vmatprep.subr.mxu0 0.0
        %673 = vmatpush1.msra.mxu0 0.0
        %674 = vmatprep.subr.mxu0 0.0
        %675 = vmatpush1.msra.mxu0 0.0
        %676 = vmatprep.subr.mxu0 0.0
        %677 = vmatpush1.msra.mxu0 0.0
        %678 = vmatprep.mubr.f32.mxu0 0.0
        %679 = vmatmul.mubr.f32.gmra.mrb[0].mxu0 %v612
        %v680 = vpop.f32.mrb[0].mxu0
        %v681 = vadd.f32 0.0, %v680
        %v682 = vpop.f32.mrb[0].mxu0
        %683 = vdwg.mxu0
        %v684 = vmul.f32 %v681, %v602
        %686 = vrot.lane.b32.xlu0 %v684, 8
        %v687 = vpop.permute.xlu0 %686
        %vm689 = vcmask 130112
        %690 = vst.msk [vmem:[%s326] sm:$0xff] %vm689, %v687
        %v691 = vmul.f32 %v598, %v602
        %s692 = scalar_lea.vmem %s290, 8 [#allocation2]
        %693 = vst.msk [vmem:[%s692] sm:$0xff] %vm414, %v691
        %v694 = vld [vmem:[%s300] sm:$0xff]
        %v695 = vld [vmem:[%s308] sm:$0xff]
        %v696 = vld [vmem:[%s308 + $0x8] sm:$0xff]
        %v697 = vld [vmem:[%s316] sm:$0xff]
        %v698 = vld [vmem:[%s316 + $0x8] sm:$0xff]
        %v699 = vmul.f32 %v694, 0.35355338
        %701 = vrot.lane.b32.xlu0 %v699, 112
        %v702 = vpop.permute.xlu0 %701
        %705 = vrot.lane.b32.xlu0 %v695, 112
        %v706 = vpop.permute.xlu0 %705
        %707 = vrot.lane.b32.xlu0 %v696, 112
        %v708 = vpop.permute.xlu0 %707
        %v709 = vsel %vm334, %v702, 0
        %v711 = vsel %vm334, %v706, 0
        %v713 = vsel %vm334, %v708, 0
        %715 = vmatprep.subr.mxu0 0.0
        %716 = vmatpush1.xpose.msra.mxu0 %v711
        %717 = vmatprep.subr.mxu0 0.0
        %718 = vmatpush1.xpose.msra.mxu0 %v713
        %719 = vmatprep.subr.mxu0 0.0
        %720 = vmatpush1.xpose.msra.mxu0 0.0
        %721 = vmatprep.subr.mxu0 0.0
        %722 = vmatpush1.xpose.msra.mxu0 0.0
        %723 = vmatprep.subr.mxu0 0.0
        %724 = vmatpush1.xpose.msra.mxu0 0.0
        %725 = vmatprep.subr.mxu0 0.0
        %726 = vmatpush1.xpose.msra.mxu0 0.0
        %727 = vmatprep.subr.mxu0 0.0
        %728 = vmatpush1.xpose.msra.mxu0 0.0
        %729 = vmatprep.subr.mxu0 0.0
        %730 = vmatpush1.xpose.msra.mxu0 0.0
        %731 = vmatprep.subr.mxu0 0.0
        %732 = vmatpush1.xpose.msra.mxu0 0.0
        %733 = vmatprep.subr.mxu0 0.0
        %734 = vmatpush1.xpose.msra.mxu0 0.0
        %735 = vmatprep.subr.mxu0 0.0
        %736 = vmatpush1.xpose.msra.mxu0 0.0
        %737 = vmatprep.subr.mxu0 0.0
        %738 = vmatpush1.xpose.msra.mxu0 0.0
        %739 = vmatprep.subr.mxu0 0.0
        %740 = vmatpush1.xpose.msra.mxu0 0.0
        %741 = vmatprep.subr.mxu0 0.0
        %742 = vmatpush1.xpose.msra.mxu0 0.0
        %743 = vmatprep.subr.mxu0 0.0
        %744 = vmatpush1.xpose.msra.mxu0 0.0
        %745 = vmatprep.subr.mxu0 0.0
        %746 = vmatpush1.xpose.msra.mxu0 0.0
        %747 = vmatprep.subr.mxu0 0.0
        %748 = vmatpush1.xpose.msra.mxu0 0.0
        %749 = vmatprep.subr.mxu0 0.0
        %750 = vmatpush1.xpose.msra.mxu0 0.0
        %751 = vmatprep.subr.mxu0 0.0
        %752 = vmatpush1.xpose.msra.mxu0 0.0
        %753 = vmatprep.subr.mxu0 0.0
        %754 = vmatpush1.xpose.msra.mxu0 0.0
        %755 = vmatprep.subr.mxu0 0.0
        %756 = vmatpush1.xpose.msra.mxu0 0.0
        %757 = vmatprep.subr.mxu0 0.0
        %758 = vmatpush1.xpose.msra.mxu0 0.0
        %759 = vmatprep.subr.mxu0 0.0
        %760 = vmatpush1.xpose.msra.mxu0 0.0
        %761 = vmatprep.subr.mxu0 0.0
        %762 = vmatpush1.xpose.msra.mxu0 0.0
        %763 = vmatprep.subr.mxu0 0.0
        %764 = vmatpush1.xpose.msra.mxu0 0.0
        %765 = vmatprep.subr.mxu0 0.0
        %766 = vmatpush1.xpose.msra.mxu0 0.0
        %767 = vmatprep.subr.mxu0 0.0
        %768 = vmatpush1.xpose.msra.mxu0 0.0
        %769 = vmatprep.subr.mxu0 0.0
        %770 = vmatpush1.xpose.msra.mxu0 0.0
        %771 = vmatprep.subr.mxu0 0.0
        %772 = vmatpush1.xpose.msra.mxu0 0.0
        %773 = vmatprep.subr.mxu0 0.0
        %774 = vmatpush1.xpose.msra.mxu0 0.0
        %775 = vmatprep.subr.mxu0 0.0
        %776 = vmatpush1.xpose.msra.mxu0 0.0
        %777 = vmatprep.subr.mxu0 0.0
        %778 = vmatpush1.xpose.msra.mxu0 0.0
        %779 = vmatprep.mubr.f32.mxu0 0.0
        %780 = vmatmul.mubr.f32.gmra.mrb[0].mxu0 %v709
        %v781 = vpop.f32.mrb[0].mxu0
        %v782 = vadd.f32 0.0, %v781
        %v783 = vpop.f32.mrb[0].mxu0
        %784 = vdwg.mxu0
        %v785 = vsel %vm414, %v782, -inf
        %786 = vmax.xlane.f32.xlu0 %v785
        %v787 = vpop.xlane.xlu0 %786
        %v788 = vsub.f32 %v782, %v787
        %v789 = vmul.f32 %v788, 1.442695
        %v790 = vpow.pop %v789
        %v791 = vsel %vm414, %v790, 0.0
        %792 = vadd.xlane.f32.xlu0 %v791
        %v793 = vpop.xlane.xlu0 %792
        %v794 = vrcp.pop %v793
        %797 = vrot.lane.b32.xlu0 %v697, 112
        %v798 = vpop.permute.xlu0 %797
        %799 = vrot.lane.b32.xlu0 %v698, 112
        %v800 = vpop.permute.xlu0 %799
        %v804 = vsel %vm414, %v790, 0
        %806 = vmatprep.subr.mxu0 0.0
        %807 = vmatpush1.msra.mxu0 %v798
        %808 = vmatprep.subr.mxu0 0.0
        %809 = vmatpush1.msra.mxu0 %v800
        %810 = vmatprep.subr.mxu0 0.0
        %811 = vmatpush1.msra.mxu0 0.0
        %812 = vmatprep.subr.mxu0 0.0
        %813 = vmatpush1.msra.mxu0 0.0
        %814 = vmatprep.subr.mxu0 0.0
        %815 = vmatpush1.msra.mxu0 0.0
        %816 = vmatprep.subr.mxu0 0.0
        %817 = vmatpush1.msra.mxu0 0.0
        %818 = vmatprep.subr.mxu0 0.0
        %819 = vmatpush1.msra.mxu0 0.0
        %820 = vmatprep.subr.mxu0 0.0
        %821 = vmatpush1.msra.mxu0 0.0
        %822 = vmatprep.subr.mxu0 0.0
        %823 = vmatpush1.msra.mxu0 0.0
        %824 = vmatprep.subr.mxu0 0.0
        %825 = vmatpush1.msra.mxu0 0.0
        %826 = vmatprep.subr.mxu0 0.0
        %827 = vmatpush1.msra.mxu0 0.0
        %828 = vmatprep.subr.mxu0 0.0
        %829 = vmatpush1.msra.mxu0 0.0
        %830 = vmatprep.subr.mxu0 0.0
        %831 = vmatpush1.msra.mxu0 0.0
        %832 = vmatprep.subr.mxu0 0.0
        %833 = vmatpush1.msra.mxu0 0.0
        %834 = vmatprep.subr.mxu0 0.0
        %835 = vmatpush1.msra.mxu0 0.0
        %836 = vmatprep.subr.mxu0 0.0
        %837 = vmatpush1.msra.mxu0 0.0
        %838 = vmatprep.subr.mxu0 0.0
        %839 = vmatpush1.msra.mxu0 0.0
        %840 = vmatprep.subr.mxu0 0.0
        %841 = vmatpush1.msra.mxu0 0.0
        %842 = vmatprep.subr.mxu0 0.0
        %843 = vmatpush1.msra.mxu0 0.0
        %844 = vmatprep.subr.mxu0 0.0
        %845 = vmatpush1.msra.mxu0 0.0
        %846 = vmatprep.subr.mxu0 0.0
        %847 = vmatpush1.msra.mxu0 0.0
        %848 = vmatprep.subr.mxu0 0.0
        %849 = vmatpush1.msra.mxu0 0.0
        %850 = vmatprep.subr.mxu0 0.0
        %851 = vmatpush1.msra.mxu0 0.0
        %852 = vmatprep.subr.mxu0 0.0
        %853 = vmatpush1.msra.mxu0 0.0
        %854 = vmatprep.subr.mxu0 0.0
        %855 = vmatpush1.msra.mxu0 0.0
        %856 = vmatprep.subr.mxu0 0.0
        %857 = vmatpush1.msra.mxu0 0.0
        %858 = vmatprep.subr.mxu0 0.0
        %859 = vmatpush1.msra.mxu0 0.0
        %860 = vmatprep.subr.mxu0 0.0
        %861 = vmatpush1.msra.mxu0 0.0
        %862 = vmatprep.subr.mxu0 0.0
        %863 = vmatpush1.msra.mxu0 0.0
        %864 = vmatprep.subr.mxu0 0.0
        %865 = vmatpush1.msra.mxu0 0.0
        %866 = vmatprep.subr.mxu0 0.0
        %867 = vmatpush1.msra.mxu0 0.0
        %868 = vmatprep.subr.mxu0 0.0
        %869 = vmatpush1.msra.mxu0 0.0
        %870 = vmatprep.mubr.f32.mxu0 0.0
        %871 = vmatmul.mubr.f32.gmra.mrb[0].mxu0 %v804
        %v872 = vpop.f32.mrb[0].mxu0
        %v873 = vadd.f32 0.0, %v872
        %v874 = vpop.f32.mrb[0].mxu0
        %875 = vdwg.mxu0
        %v876 = vmul.f32 %v873, %v794
        %878 = vrot.lane.b32.xlu0 %v876, 16
        %v879 = vpop.permute.xlu0 %878
        %vm881 = vcmask 195712
        %882 = vst.msk [vmem:[%s326] sm:$0xff] %vm881, %v879
        %v883 = vmul.f32 %v790, %v794
        %s884 = scalar_lea.vmem %s290, 16 [#allocation2]
        %885 = vst.msk [vmem:[%s884] sm:$0xff] %vm414, %v883
        %v886 = vld [vmem:[%s300] sm:$0xff]
        %v887 = vld [vmem:[%s308] sm:$0xff]
        %v888 = vld [vmem:[%s308 + $0x8] sm:$0xff]
        %v889 = vld [vmem:[%s316] sm:$0xff]
        %v890 = vld [vmem:[%s316 + $0x8] sm:$0xff]
        %v891 = vmul.f32 %v886, 0.35355338
        %893 = vrot.lane.b32.xlu0 %v891, 104
        %v894 = vpop.permute.xlu0 %893
        %897 = vrot.lane.b32.xlu0 %v887, 104
        %v898 = vpop.permute.xlu0 %897
        %899 = vrot.lane.b32.xlu0 %v888, 104
        %v900 = vpop.permute.xlu0 %899
        %v901 = vsel %vm334, %v894, 0
        %v903 = vsel %vm334, %v898, 0
        %v905 = vsel %vm334, %v900, 0
        %907 = vmatprep.subr.mxu0 0.0
        %908 = vmatpush1.xpose.msra.mxu0 %v903
        %909 = vmatprep.subr.mxu0 0.0
        %910 = vmatpush1.xpose.msra.mxu0 %v905
        %911 = vmatprep.subr.mxu0 0.0
        %912 = vmatpush1.xpose.msra.mxu0 0.0
        %913 = vmatprep.subr.mxu0 0.0
        %914 = vmatpush1.xpose.msra.mxu0 0.0
        %915 = vmatprep.subr.mxu0 0.0
        %916 = vmatpush1.xpose.msra.mxu0 0.0
        %917 = vmatprep.subr.mxu0 0.0
        %918 = vmatpush1.xpose.msra.mxu0 0.0
        %919 = vmatprep.subr.mxu0 0.0
        %920 = vmatpush1.xpose.msra.mxu0 0.0
        %921 = vmatprep.subr.mxu0 0.0
        %922 = vmatpush1.xpose.msra.mxu0 0.0
        %923 = vmatprep.subr.mxu0 0.0
        %924 = vmatpush1.xpose.msra.mxu0 0.0
        %925 = vmatprep.subr.mxu0 0.0
        %926 = vmatpush1.xpose.msra.mxu0 0.0
        %927 = vmatprep.subr.mxu0 0.0
        %928 = vmatpush1.xpose.msra.mxu0 0.0
        %929 = vmatprep.subr.mxu0 0.0
        %930 = vmatpush1.xpose.msra.mxu0 0.0
        %931 = vmatprep.subr.mxu0 0.0
        %932 = vmatpush1.xpose.msra.mxu0 0.0
        %933 = vmatprep.subr.mxu0 0.0
        %934 = vmatpush1.xpose.msra.mxu0 0.0
        %935 = vmatprep.subr.mxu0 0.0
        %936 = vmatpush1.xpose.msra.mxu0 0.0
        %937 = vmatprep.subr.mxu0 0.0
        %938 = vmatpush1.xpose.msra.mxu0 0.0
        %939 = vmatprep.subr.mxu0 0.0
        %940 = vmatpush1.xpose.msra.mxu0 0.0
        %941 = vmatprep.subr.mxu0 0.0
        %942 = vmatpush1.xpose.msra.mxu0 0.0
        %943 = vmatprep.subr.mxu0 0.0
        %944 = vmatpush1.xpose.msra.mxu0 0.0
        %945 = vmatprep.subr.mxu0 0.0
        %946 = vmatpush1.xpose.msra.mxu0 0.0
        %947 = vmatprep.subr.mxu0 0.0
        %948 = vmatpush1.xpose.msra.mxu0 0.0
        %949 = vmatprep.subr.mxu0 0.0
        %950 = vmatpush1.xpose.msra.mxu0 0.0
        %951 = vmatprep.subr.mxu0 0.0
        %952 = vmatpush1.xpose.msra.mxu0 0.0
        %953 = vmatprep.subr.mxu0 0.0
        %954 = vmatpush1.xpose.msra.mxu0 0.0
        %955 = vmatprep.subr.mxu0 0.0
        %956 = vmatpush1.xpose.msra.mxu0 0.0
        %957 = vmatprep.subr.mxu0 0.0
        %958 = vmatpush1.xpose.msra.mxu0 0.0
        %959 = vmatprep.subr.mxu0 0.0
        %960 = vmatpush1.xpose.msra.mxu0 0.0
        %961 = vmatprep.subr.mxu0 0.0
        %962 = vmatpush1.xpose.msra.mxu0 0.0
        %963 = vmatprep.subr.mxu0 0.0
        %964 = vmatpush1.xpose.msra.mxu0 0.0
        %965 = vmatprep.subr.mxu0 0.0
        %966 = vmatpush1.xpose.msra.mxu0 0.0
        %967 = vmatprep.subr.mxu0 0.0
        %968 = vmatpush1.xpose.msra.mxu0 0.0
        %969 = vmatprep.subr.mxu0 0.0
        %970 = vmatpush1.xpose.msra.mxu0 0.0
        %971 = vmatprep.mubr.f32.mxu0 0.0
        %972 = vmatmul.mubr.f32.gmra.mrb[0].mxu0 %v901
        %v973 = vpop.f32.mrb[0].mxu0
        %v974 = vadd.f32 0.0, %v973
        %v975 = vpop.f32.mrb[0].mxu0
        %976 = vdwg.mxu0
        %v977 = vsel %vm414, %v974, -inf
        %978 = vmax.xlane.f32.xlu0 %v977
        %v979 = vpop.xlane.xlu0 %978
        %v980 = vsub.f32 %v974, %v979
        %v981 = vmul.f32 %v980, 1.442695
        %v982 = vpow.pop %v981
        %v983 = vsel %vm414, %v982, 0.0
        %984 = vadd.xlane.f32.xlu0 %v983
        %v985 = vpop.xlane.xlu0 %984
        %v986 = vrcp.pop %v985
        %989 = vrot.lane.b32.xlu0 %v889, 104
        %v990 = vpop.permute.xlu0 %989
        %991 = vrot.lane.b32.xlu0 %v890, 104
        %v992 = vpop.permute.xlu0 %991
        %v996 = vsel %vm414, %v982, 0
        %998 = vmatprep.subr.mxu0 0.0
        %999 = vmatpush1.msra.mxu0 %v990
        %1000 = vmatprep.subr.mxu0 0.0
        %1001 = vmatpush1.msra.mxu0 %v992
        %1002 = vmatprep.subr.mxu0 0.0
        %1003 = vmatpush1.msra.mxu0 0.0
        %1004 = vmatprep.subr.mxu0 0.0
        %1005 = vmatpush1.msra.mxu0 0.0
        %1006 = vmatprep.subr.mxu0 0.0
        %1007 = vmatpush1.msra.mxu0 0.0
        %1008 = vmatprep.subr.mxu0 0.0
        %1009 = vmatpush1.msra.mxu0 0.0
        %1010 = vmatprep.subr.mxu0 0.0
        %1011 = vmatpush1.msra.mxu0 0.0
        %1012 = vmatprep.subr.mxu0 0.0
        %1013 = vmatpush1.msra.mxu0 0.0
        %1014 = vmatprep.subr.mxu0 0.0
        %1015 = vmatpush1.msra.mxu0 0.0
        %1016 = vmatprep.subr.mxu0 0.0
        %1017 = vmatpush1.msra.mxu0 0.0
        %1018 = vmatprep.subr.mxu0 0.0
        %1019 = vmatpush1.msra.mxu0 0.0
        %1020 = vmatprep.subr.mxu0 0.0
        %1021 = vmatpush1.msra.mxu0 0.0
        %1022 = vmatprep.subr.mxu0 0.0
        %1023 = vmatpush1.msra.mxu0 0.0
        %1024 = vmatprep.subr.mxu0 0.0
        %1025 = vmatpush1.msra.mxu0 0.0
        %1026 = vmatprep.subr.mxu0 0.0
        %1027 = vmatpush1.msra.mxu0 0.0
        %1028 = vmatprep.subr.mxu0 0.0
        %1029 = vmatpush1.msra.mxu0 0.0
        %1030 = vmatprep.subr.mxu0 0.0
        %1031 = vmatpush1.msra.mxu0 0.0
        %1032 = vmatprep.subr.mxu0 0.0
        %1033 = vmatpush1.msra.mxu0 0.0
        %1034 = vmatprep.subr.mxu0 0.0
        %1035 = vmatpush1.msra.mxu0 0.0
        %1036 = vmatprep.subr.mxu0 0.0
        %1037 = vmatpush1.msra.mxu0 0.0
        %1038 = vmatprep.subr.mxu0 0.0
        %1039 = vmatpush1.msra.mxu0 0.0
        %1040 = vmatprep.subr.mxu0 0.0
        %1041 = vmatpush1.msra.mxu0 0.0
        %1042 = vmatprep.subr.mxu0 0.0
        %1043 = vmatpush1.msra.mxu0 0.0
        %1044 = vmatprep.subr.mxu0 0.0
        %1045 = vmatpush1.msra.mxu0 0.0
        %1046 = vmatprep.subr.mxu0 0.0
        %1047 = vmatpush1.msra.mxu0 0.0
        %1048 = vmatprep.subr.mxu0 0.0
        %1049 = vmatpush1.msra.mxu0 0.0
        %1050 = vmatprep.subr.mxu0 0.0
        %1051 = vmatpush1.msra.mxu0 0.0
        %1052 = vmatprep.subr.mxu0 0.0
        %1053 = vmatpush1.msra.mxu0 0.0
        %1054 = vmatprep.subr.mxu0 0.0
        %1055 = vmatpush1.msra.mxu0 0.0
        %1056 = vmatprep.subr.mxu0 0.0
        %1057 = vmatpush1.msra.mxu0 0.0
        %1058 = vmatprep.subr.mxu0 0.0
        %1059 = vmatpush1.msra.mxu0 0.0
        %1060 = vmatprep.subr.mxu0 0.0
        %1061 = vmatpush1.msra.mxu0 0.0
        %1062 = vmatprep.mubr.f32.mxu0 0.0
        %1063 = vmatmul.mubr.f32.gmra.mrb[0].mxu0 %v996
        %v1064 = vpop.f32.mrb[0].mxu0
        %v1065 = vadd.f32 0.0, %v1064
        %v1066 = vpop.f32.mrb[0].mxu0
        %1067 = vdwg.mxu0
        %v1068 = vmul.f32 %v1065, %v986
        %1070 = vrot.lane.b32.xlu0 %v1068, 24
        %v1071 = vpop.permute.xlu0 %1070
        %vm1073 = vcmask 261312
        %1074 = vst.msk [vmem:[%s326] sm:$0xff] %vm1073, %v1071
        %v1075 = vmul.f32 %v982, %v986
        %s1076 = scalar_lea.vmem %s290, 24 [#allocation2]
        %1077 = vst.msk [vmem:[%s1076] sm:$0xff] %vm414, %v1075
        %p1078 = scmp.lt.s32.totalorder %s24, 1
        %s1079 = scalar_select %p1078, %s24, 1
        %p1080 = scmp.lt.s32.totalorder %s26, 0
        %s1081 = scalar_select %p1080, %s26, 0
        %p1082 = scmp.lt.s32.totalorder %s25, 0
        %s1083 = scalar_select %p1082, %s25, 0
        %s1084 = sadd.s32 %s1083, %s1081
        %s1085 = sadd.s32 %s1084, %s1079
        %s1086 = smul.addr %s1085, 8
        %s1087 = scalar_lea.vmem %s3, %s1086
        %s1088 = sand.u32 %s166, 1
        %s1089 = scalar_lea.sflag [#allocation3], %s1088
        %s1090 = sand.u32 %s166, 1
        %s1091 = smul.addr %s1090, 32
        %s1092 = scalar_lea.vmem [#allocation2], %s1091
        // Predicated region
        $region33: #{attention_layer_forward.8} parent=31 // pred_check
          %p1093 = pneg %p146
        $region34: #{attention_layer_forward.8} parent=31 // pred_check_branch
          %1095 = sbr.rel (%p1093) target = $region36
        $region35: #{attention_layer_forward.8} parent=31 // pred_region
          _
        $region36: #{attention_layer_forward.8} parent=31 // pred_fallthru
          _
        // Predicated region
        $region37: #{attention_layer_forward.8} parent=31 // pred_check
          %p1096 = pneg %p176
        $region38: #{attention_layer_forward.8} parent=31 // pred_check_branch
          %1098 = sbr.rel (%p1096) target = $region40
        $region39: #{attention_layer_forward.8} parent=31 // pred_region
          %s1099 = smul.u32 4, %s25
          %s1101 = ssub.s32 512, 512
          %1102 = vsyncadd %s1089, %s1101
          %s1103 = sadd.s32 %s26, %s1099
          %s1104 = smul.addr %s24, 4
          %s1105 = sadd.s32 %s1103, %s1104
          %s1106 = smul.addr %s1105, 128
          %s1107 = scalar_lea.hbm %s4, %s1106
          %s1108 = sshll.u32 %s1092, 4
          %s1109 = int_to_ptr.vmem [resolvable:$true] %s1108
          %1114 = dma.vmem_to_hbm [thread:$0]  %s1109, 512, %s1107, %s1089, 128, 128, 8
        $region40: #{attention_layer_forward.8} parent=31 // pred_fallthru
          _
      $region32: #{attention_layer_forward.8} parent=5 // pred_fallthru
        _
      %p1115 = scmp.le.s32.totalorder 2, %s14
      // Predicated region
      $region41: #{attention_layer_forward.8} parent=5 // pred_check
        %p1116 = pneg %p1115
      $region42: #{attention_layer_forward.8} parent=5 // pred_check_branch
        %1118 = sbr.rel (%p1116) target = $region44
      $region43: #{attention_layer_forward.8} parent=5 // pred_region
        %s1119 = ssub.s32 %s14, 2
        // Predicated region
        $region45: #{attention_layer_forward.8} parent=43 // pred_check
          %p1120 = pneg %p152
        $region46: #{attention_layer_forward.8} parent=43 // pred_check_branch
          %1122 = sbr.rel (%p1120) target = $region48
        $region47: #{attention_layer_forward.8} parent=43 // pred_region
          %p1123 = scmp.lt.s32.totalorder %s27, 1
          %s1124 = scalar_select %p1123, %s27, 1
          %p1125 = scmp.lt.s32.totalorder %s29, 0
          %s1126 = scalar_select %p1125, %s29, 0
          %p1127 = scmp.lt.s32.totalorder %s28, 0
          %s1128 = scalar_select %p1127, %s28, 0
          %s1129 = sadd.s32 %s1128, %s1126
          %s1130 = sadd.s32 %s1129, %s1124
          %s1131 = smul.addr %s1130, 8
          %s1132 = scalar_lea.vmem %s3, %s1131
        $region48: #{attention_layer_forward.8} parent=43 // pred_fallthru
          _
        // Predicated region
        $region49: #{attention_layer_forward.8} parent=43 // pred_check
          %p1133 = pneg %p182
        $region50: #{attention_layer_forward.8} parent=43 // pred_check_branch
          %1135 = sbr.rel (%p1133) target = $region52
        $region51: #{attention_layer_forward.8} parent=43 // pred_region
          %s1136 = sand.u32 %s167, 1
          %s1137 = scalar_lea.sflag [#allocation3], %s1136
          %s1138 = sand.u32 %s167, 1
          %s1139 = smul.addr %s1138, 32
          %s1140 = scalar_lea.vmem [#allocation2], %s1139
          %1141 = dma.done %s1137, 512
        $region52: #{attention_layer_forward.8} parent=43 // pred_fallthru
          _
      $region44: #{attention_layer_forward.8} parent=5 // pred_fallthru
        _
    $region6: #{attention_layer_forward.8} parent=1 // loop_footer
      %s18 = sadd.s32 1, %s14
    $region7: #{attention_layer_forward.8} parent=1 // loop_footer_branch
      %13 = sbr.rel target = $region3
    $region8: #{attention_layer_forward.8} parent=1 // loop_exit
      _
    %1142 = vsyncpa [#allocation3], 1
    %s1143 = scalar_lea.sflag [#allocation3], 1
    %1144 = vsyncpa %s1143, 1

// kernel: attention_layer_forward.9
$region0: #{attention_layer_forward.9}
  #allocation0 [shape = 'u32[]', space=smem, size = 0x4, offset = 0x4, fixed_abs, tag = 'smem constant byte address 0x4 - core index']
  #allocation1 [shape = 'u32[144,128]{1,0:T(1,128)}', space=vmem, size = 0x12000, scoped, tag = 'internal scratch']
  #allocation2 [shape = 'f32[16,32]{1,0:T(8,128)}', space=vmem, size = 0x2000, scoped, tag = 'scratch operand']
  %s0 = inlined_call_operand.vmem [shape: f32[16,32], index: 0, kind: input, shape index: {}]
  %s1 = inlined_call_operand.vmem [shape: f32[32,32], index: 1, kind: input, shape index: {}]
  %s2 = inlined_call_operand.vmem [shape: f32[1,32], index: 2, kind: input, shape index: {}]
  %s3 = inlined_call_operand.hbm [shape: f32[16,32], index: 3, kind: output, shape index: {}]
  %s4 = sld [smem:[#allocation0]]
  $region30: #{attention_layer_forward.9} parent=0
    _
  %s6 = ssub.s32 1, %s4
  %s7 = scalar_select 0, %s6, %s4
  $region1: #{attention_layer_forward.9} parent=0
    #allocation3 [shape = 'u8[8192]{0}', space=vmem, size = 0x2000, scoped, tag = 'output window, operand 0, single buffered']
    #allocation4 [shape = 's32[1]{0}', space=sflag, size = 0x4, scoped, tag = 'scoped memory for attention_layer_forward.9']
    %8 = vsyncpa [#allocation4], 0
    // Predicated region
    $region2: #{attention_layer_forward.9} parent=1 // pred_check
      _
    $region3: #{attention_layer_forward.9} parent=1 // pred_check_branch
      %10 = sbr.rel (0) target = $region5
    $region4: #{attention_layer_forward.9} parent=1 // pred_region
      _
    $region5: #{attention_layer_forward.9} parent=1 // pred_fallthru
      _
    // Predicated region
    $region6: #{attention_layer_forward.9} parent=1 // pred_check
      _
    $region7: #{attention_layer_forward.9} parent=1 // pred_check_branch
      %12 = sbr.rel (0) target = $region9
    $region8: #{attention_layer_forward.9} parent=1 // pred_region
      _
    $region9: #{attention_layer_forward.9} parent=1 // pred_fallthru
      _
    // Predicated region
    $region10: #{attention_layer_forward.9} parent=1 // pred_check
      _
    $region11: #{attention_layer_forward.9} parent=1 // pred_check_branch
      %14 = sbr.rel (0) target = $region13
    $region12: #{attention_layer_forward.9} parent=1 // pred_region
      _
    $region13: #{attention_layer_forward.9} parent=1 // pred_fallthru
      _
    %p15 = scmp.eq.s32.totalorder 0, 0
    // Predicated region
    $region14: #{attention_layer_forward.9} parent=1 // pred_check
      %p16 = pneg %p15
    $region15: #{attention_layer_forward.9} parent=1 // pred_check_branch
      %18 = sbr.rel (%p16) target = $region17
    $region16: #{attention_layer_forward.9} parent=1 // pred_region
      %vm19 = vcmask 261120
      %20 = vst.msk [vmem:[#allocation2] sm:$0xff] %vm19, 0.0
      %21 = vst.msk [vmem:[#allocation2 + $0x8] sm:$0xff] %vm19, 0.0
    $region17: #{attention_layer_forward.9} parent=1 // pred_fallthru
      _
    %v22 = vld [vmem:[#allocation2] sm:$0xff]
    %v23 = vld [vmem:[#allocation2 + $0x8] sm:$0xff]
    %v24 = vld [vmem:[%s0] sm:$0xff]
    %v25 = vld [vmem:[%s0 + $0x8] sm:$0xff]
    %v26 = vld [vmem:[%s1] sm:$0xff]
    %v27 = vld [vmem:[%s1 + $0x8] sm:$0xff]
    %v28 = vld [vmem:[%s1 + $0x10] sm:$0xff]
    %v29 = vld [vmem:[%s1 + $0x18] sm:$0xff]
    %vm30 = vcmask 261120
    %v32 = vsel %vm30, %v24, 0
    %v35 = vsel %vm30, %v25, 0
    %37 = vmatprep.subr.mxu0 0.0
    %38 = vmatpush1.msra.mxu0 %v26
    %39 = vmatprep.subr.mxu0 0.0
    %40 = vmatpush1.msra.mxu0 %v27
    %41 = vmatprep.subr.mxu0 0.0
    %42 = vmatpush1.msra.mxu0 %v28
    %43 = vmatprep.subr.mxu0 0.0
    %44 = vmatpush1.msra.mxu0 %v29
    %45 = vmatprep.subr.mxu0 0.0
    %46 = vmatpush1.msra.mxu0 0.0
    %47 = vmatprep.subr.mxu0 0.0
    %48 = vmatpush1.msra.mxu0 0.0
    %49 = vmatprep.subr.mxu0 0.0
    %50 = vmatpush1.msra.mxu0 0.0
    %51 = vmatprep.subr.mxu0 0.0
    %52 = vmatpush1.msra.mxu0 0.0
    %53 = vmatprep.subr.mxu0 0.0
    %54 = vmatpush1.msra.mxu0 0.0
    %55 = vmatprep.subr.mxu0 0.0
    %56 = vmatpush1.msra.mxu0 0.0
    %57 = vmatprep.subr.mxu0 0.0
    %58 = vmatpush1.msra.mxu0 0.0
    %59 = vmatprep.subr.mxu0 0.0
    %60 = vmatpush1.msra.mxu0 0.0
    %61 = vmatprep.subr.mxu0 0.0
    %62 = vmatpush1.msra.mxu0 0.0
    %63 = vmatprep.subr.mxu0 0.0
    %64 = vmatpush1.msra.mxu0 0.0
    %65 = vmatprep.subr.mxu0 0.0
    %66 = vmatpush1.msra.mxu0 0.0
    %67 = vmatprep.subr.mxu0 0.0
    %68 = vmatpush1.msra.mxu0 0.0
    %69 = vmatprep.subr.mxu0 0.0
    %70 = vmatpush1.msra.mxu0 0.0
    %71 = vmatprep.subr.mxu0 0.0
    %72 = vmatpush1.msra.mxu0 0.0
    %73 = vmatprep.subr.mxu0 0.0
    %74 = vmatpush1.msra.mxu0 0.0
    %75 = vmatprep.subr.mxu0 0.0
    %76 = vmatpush1.msra.mxu0 0.0
    %77 = vmatprep.subr.mxu0 0.0
    %78 = vmatpush1.msra.mxu0 0.0
    %79 = vmatprep.subr.mxu0 0.0
    %80 = vmatpush1.msra.mxu0 0.0
    %81 = vmatprep.subr.mxu0 0.0
    %82 = vmatpush1.msra.mxu0 0.0
    %83 = vmatprep.subr.mxu0 0.0
    %84 = vmatpush1.msra.mxu0 0.0
    %85 = vmatprep.subr.mxu0 0.0
    %86 = vmatpush1.msra.mxu0 0.0
    %87 = vmatprep.subr.mxu0 0.0
    %88 = vmatpush1.msra.mxu0 0.0
    %89 = vmatprep.subr.mxu0 0.0
    %90 = vmatpush1.msra.mxu0 0.0
    %91 = vmatprep.subr.mxu0 0.0
    %92 = vmatpush1.msra.mxu0 0.0
    %93 = vmatprep.subr.mxu0 0.0
    %94 = vmatpush1.msra.mxu0 0.0
    %95 = vmatprep.subr.mxu0 0.0
    %96 = vmatpush1.msra.mxu0 0.0
    %97 = vmatprep.subr.mxu0 0.0
    %98 = vmatpush1.msra.mxu0 0.0
    %99 = vmatprep.subr.mxu0 0.0
    %100 = vmatpush1.msra.mxu0 0.0
    %101 = vmatprep.mubr.f32.mxu0 0.0
    %102 = vmatmul.mubr.f32.gmra.mrb[0].mxu0 %v32
    %v103 = vpop.f32.mrb[0].mxu0
    %v104 = vadd.f32 0.0, %v103
    %v105 = vpop.f32.mrb[0].mxu0
    %106 = vmatprep.mubr.f32.mxu0 0.0
    %107 = vmatmul.mubr.f32.gmra.mrb[0].mxu0 %v35
    %v108 = vpop.f32.mrb[0].mxu0
    %v109 = vadd.f32 0.0, %v108
    %v110 = vpop.f32.mrb[0].mxu0
    %111 = vdwg.mxu0
    %v112 = vadd.f32 %v22, %v104
    %v113 = vadd.f32 %v23, %v109
    %114 = vst.msk [vmem:[#allocation2] sm:$0xff] %vm30, %v112
    %115 = vst.msk [vmem:[#allocation2 + $0x8] sm:$0xff] %vm30, %v113
    // Predicated region
    $region18: #{attention_layer_forward.9} parent=1 // pred_check
      %p116 = pneg %p15
    $region19: #{attention_layer_forward.9} parent=1 // pred_check_branch
      %118 = sbr.rel (%p116) target = $region21
    $region20: #{attention_layer_forward.9} parent=1 // pred_region
      %v119 = vld [vmem:[#allocation2] sm:$0xff]
      %v120 = vld [vmem:[#allocation2 + $0x8] sm:$0xff]
      %v121 = vld [vmem:[%s2] sm:$0x1]
      %v123 = vlaneseq
      %v124 = vshrl.u32 %v123, 7
      %v125 = vsub.s32 0, %v124
      %v126 = vrot.slane %v121, %v125
      %v128 = vadd.f32 %v119, %v126
      %v129 = vadd.f32 %v120, %v126
      %130 = vst.msk [vmem:[#allocation3] sm:$0xff] %vm30, %v128
      %131 = vst.msk [vmem:[#allocation3 + $0x8] sm:$0xff] %vm30, %v129
    $region21: #{attention_layer_forward.9} parent=1 // pred_fallthru
      _
    // Predicated region
    $region22: #{attention_layer_forward.9} parent=1 // pred_check
      _
    $region23: #{attention_layer_forward.9} parent=1 // pred_check_branch
      %133 = sbr.rel (0) target = $region25
    $region24: #{attention_layer_forward.9} parent=1 // pred_region
      %s135 = ssub.s32 256, 256
      %136 = vsyncadd [#allocation4], %s135
      %s137 = sshll.u32 [#allocation3], 4
      %s138 = int_to_ptr.vmem [resolvable:$true] %s137
      %143 = dma.vmem_to_hbm [thread:$0]  %s138, 256, %s3, [#allocation4], 128, 128, 8
    $region25: #{attention_layer_forward.9} parent=1 // pred_fallthru
      _
    // Predicated region
    $region26: #{attention_layer_forward.9} parent=1 // pred_check
      _
    $region27: #{attention_layer_forward.9} parent=1 // pred_check_branch
      %145 = sbr.rel (0) target = $region29
    $region28: #{attention_layer_forward.9} parent=1 // pred_region
      %146 = dma.done [#allocation4], 256
    $region29: #{attention_layer_forward.9} parent=1 // pred_fallthru
      _
    %147 = vsyncpa [#allocation4], 1

</llo_original>
